<compile_context>
chip_gen: v6e
topology: v6e:2x2x1
jax: 0.10.0
libtpu: 0.0.40
codegen_flags: <defaults>
</compile_context>

<pallas_src>
import functools

import jax
import jax.numpy as jnp
from jax import lax
from jax.experimental import pallas as pl
from jax.experimental.pallas import tpu as pltpu


# ----------------------------- Pallas kernel --------------------------------
def fwd_kernel(x_dim,
               mu_ref, sig_ref, a_ref,
               w_ih_mu_ref, w_ih_sig_ref, w_ih_a_ref, b_gate_ref,
               w_hh_ref, w1_ref, b1_ref, w_head_ref, b_head_ref,
               state0_ref,
               head_ref, state_ref):
    """Whole forward pass in one kernel invocation (everything VMEM-resident)."""
    T = mu_ref.shape[0]
    H4 = w_hh_ref.shape[0]          # 4 * cell_dim (lane-dense gate width)
    H = H4 // 4
    out_pad = head_ref.shape[1]

    # ---- hoisted constants (computed once; JAX does not CSE broadcasts) ----
    lane4h = lax.broadcasted_iota(jnp.int32, (1, H4), 1)
    is_g = (lane4h >= 2 * H) & (lane4h < 3 * H)
    # tanh -> gate affine: i/f/o columns were pre-scaled by 0.5 in param prep,
    # so 0.5*tanh(z/2)+0.5 == sigmoid(z); g column is tanh(z) directly.
    act_scale = jnp.where(is_g, 1.0, 0.5).astype(jnp.float32)
    act_off = jnp.where(is_g, 0.0, 0.5).astype(jnp.float32)
    lane_valid = (lane4h < H).astype(jnp.float32)      # zero junk lanes of (h, c) output
    col = lax.broadcasted_iota(jnp.int32, (1, out_pad), 1)
    sig_half = col >= x_dim                            # ReLU only the log-sigma half

    # Input contribution to the LSTM gates for ALL timesteps. The concat of
    # [mu, sigma, a] is realized as three matmuls against the row-split w_ih.
    xg = (jnp.dot(mu_ref[...], w_ih_mu_ref[...], preferred_element_type=jnp.float32)
          + jnp.dot(sig_ref[...], w_ih_sig_ref[...], preferred_element_type=jnp.float32)
          + jnp.dot(a_ref[...], w_ih_a_ref[...], preferred_element_type=jnp.float32)
          + b_gate_ref[...])                                        # (T, 4H) f32

    # Recurrent weight as bf16: single-pass MXU matmul on the serial chain,
    # f32 accumulation via preferred_element_type. Loaded/cast once.
    w_hh_bf = w_hh_ref[...].astype(jnp.bfloat16)                    # (4H, 4H), rows >= H zero
    # Per-step MLP / head weights (kept f32 — these dots are off the critical
    # path and act as free filler in the idle MXU slots of the recurrence).
    w1 = w1_ref[...]                                                # (4H, L), rows >= H zero
    b1 = b1_ref[...]                                                # (1, L)
    w_head = w_head_ref[...]                                        # (L, out_pad)
    b_head = b_head_ref[...]                                        # (1, out_pad)

    # (h, c) carried as full 4H-lane vregs; only lanes [0, H) are meaningful.
    h_full = state0_ref[pl.ds(0, 1), :]                             # (1, 4H)
    c_full = state0_ref[pl.ds(1, 1), :]                             # (1, 4H)

    # Fully unrolled serial recurrence (T small, static).
    for t in range(T):
        # ---- critical path: bf16 recurrent dot -> one tanh -> gate math ----
        z = xg[t:t + 1, :] + jnp.dot(h_full.astype(jnp.bfloat16), w_hh_bf,
                                     preferred_element_type=jnp.float32)       # (1, 4H)
        s = act_scale * jnp.tanh(z) + act_off    # [sig(i) | sig(f) | tanh(g) | sig(o)]
        f_al = pltpu.roll(s, 3 * H, axis=1)      # sig(f)  aligned to lanes [0, H)
        g_al = pltpu.roll(s, 2 * H, axis=1)      # tanh(g) aligned to lanes [0, H)
        o_al = pltpu.roll(s, 1 * H, axis=1)      # sig(o)  aligned to lanes [0, H)
        c_full = f_al * c_full + s * g_al        # lanes [0,H): f*c + i*g
        h_full = o_al * jnp.tanh(c_full)         # lanes [0,H): o*tanh(c)

        # ---- per-step MLP + fused heads: independent of later steps, so it
        # overlaps the recurrence tail (only the last step's row is exposed).
        # w1 rows >= H are zero, so junk lanes of h never contribute. ----
        out1 = jnp.maximum(
            jnp.dot(h_full, w1, preferred_element_type=jnp.float32) + b1, 0.0)  # (1, L)
        head = jnp.dot(out1, w_head, preferred_element_type=jnp.float32) + b_head
        head_ref[pl.ds(t, 1), :] = jnp.where(sig_half, jnp.maximum(head, 0.0), head)

    # Packed final state (junk lanes zeroed): row 0 = h_n, row 1 = c_n.
    state_ref[pl.ds(0, 1), :] = h_full * lane_valid
    state_ref[pl.ds(1, 1), :] = c_full * lane_valid


# ------------------------ kernel-ready parameter prep ------------------------
def prepare_kernel_params(params, x_dim, a_dim):
    """Build kernel-layout params (do this once, outside the hot path)."""
    w_ih = params["w_ih"].astype(jnp.float32)     # (2*x_dim + a_dim, 4H)
    w_hh = params["w_hh"].astype(jnp.float32)     # (H, 4H)
    b = params["b"].astype(jnp.float32)           # (1, 4H)
    H = w_hh.shape[0]
    H4 = 4 * H
    L = params["w1"].shape[1]

    # Pre-scale the i/f/o gate columns by 0.5 so a single in-kernel tanh +
    # per-lane affine reproduces the sigmoid gates (sigmoid(z)=0.5*tanh(z/2)+0.5).
    # The g columns stay at 1.0 (tanh applied directly). Gate order [i, f, g, o].
    gate_scale = jnp.full((1, H4), 0.5, jnp.float32).at[:, 2 * H:3 * H].set(1.0)
    w_ih_s = w_ih * gate_scale
    w_hh_s = w_hh * gate_scale
    b_gate = b * gate_scale

    # Fused + lane-padded head: [w_mu | w_sig | 0...], output padded to a lane multiple.
    out_pad = ((2 * x_dim + 127) // 128) * 128
    w_head = jnp.zeros((L, out_pad), jnp.float32)
    w_head = w_head.at[:, :x_dim].set(params["w_mu"]).at[:, x_dim:2 * x_dim].set(params["w_sig"])
    b_head = jnp.zeros((1, out_pad), jnp.float32)
    b_head = b_head.at[:, :x_dim].set(params["b_mu"]).at[:, x_dim:2 * x_dim].set(params["b_sig"])

    return {
        # row-split input->gate weights (kernel-side concat of [mu, sigma, a])
        "w_ih_mu": w_ih_s[:x_dim],
        "w_ih_sig": w_ih_s[x_dim:2 * x_dim],
        "w_ih_a": w_ih_s[2 * x_dim:],
        "b_gate": b_gate,
        # zero-padded recurrent weight: rows >= H are zero so junk lanes of the
        # 4H-wide carried h never contribute.
        "w_hh_pad": jnp.zeros((H4, H4), jnp.float32).at[:H, :].set(w_hh_s),
        "w1_pad": jnp.zeros((H4, L), jnp.float32).at[:H, :].set(params["w1"]),
        "b1": params["b1"].astype(jnp.float32),
        "w_head_pad": w_head,
        "b_head_pad": b_head,
    }


# ------------------------------ wrapper --------------------------------------
def forward_model_recurrent_sigma(mu_t, sigma_t, a_t, kparams, last_state=None):
    mu_t = mu_t.astype(jnp.float32)
    sigma_t = sigma_t.astype(jnp.float32)
    a_t = a_t.astype(jnp.float32)
    T, x_dim = mu_t.shape
    a_dim = a_t.shape[1]
    H4 = kparams["w_hh_pad"].shape[0]
    H = H4 // 4
    L = kparams["w1_pad"].shape[1]
    out_pad = kparams["w_head_pad"].shape[1]

    if last_state is None:
        state0 = jnp.zeros((2, H4), jnp.float32)
    else:
        h0, c0 = last_state                      # (1, H) each
        state0 = jnp.zeros((2, H4), jnp.float32)
        state0 = state0.at[0:1, :H].set(h0).at[1:2, :H].set(c0)

    # Advisory cost estimate for XLA scheduling around the custom call.
    in_dim = 2 * x_dim + a_dim
    flops = 2 * T * (in_dim * H4 + H4 * H4 + H4 * L + L * out_pad)
    weight_elems = sum(int(kparams[k].size) for k in (
        "w_ih_mu", "w_ih_sig", "w_ih_a", "b_gate", "w_hh_pad",
        "w1_pad", "b1", "w_head_pad", "b_head_pad"))
    bytes_accessed = 4 * (mu_t.size + sigma_t.size + a_t.size + state0.size
                          + weight_elems + T * out_pad + 2 * H4)

    vmem = pl.BlockSpec(memory_space=pltpu.MemorySpace.VMEM)
    # NOTE: everything stays VMEM-resident (no grid). For very large T (or a
    # streaming rollout of repeated calls) this should become a 1-D grid over
    # T-chunks with the (h, c) carry in scratch; on v7x an additional leading
    # "parallel" batch axis would engage the second TensorCore.
    fn = pl.pallas_call(
        functools.partial(fwd_kernel, x_dim),
        out_shape=(
            jax.ShapeDtypeStruct((T, out_pad), jnp.float32),   # fused [mu | relu(log_sigma) | pad]
            jax.ShapeDtypeStruct((2, H4), jnp.float32),        # packed (h_n ; c_n), lanes >= H zeroed
        ),
        in_specs=[vmem] * 13,
        out_specs=(vmem, vmem),
        input_output_aliases={12: 1},                          # state0 buffer aliases state output
        compiler_params=pltpu.CompilerParams(vmem_limit_bytes=16 * 1024 * 1024),
        cost_estimate=pl.CostEstimate(flops=flops,
                                      transcendentals=2 * T * H4,
                                      bytes_accessed=bytes_accessed),
    )
    head, state = fn(
        mu_t, sigma_t, a_t,
        kparams["w_ih_mu"], kparams["w_ih_sig"], kparams["w_ih_a"], kparams["b_gate"],
        kparams["w_hh_pad"], kparams["w1_pad"], kparams["b1"],
        kparams["w_head_pad"], kparams["b_head_pad"],
        state0)

    mu_tp1 = head[:, :x_dim]
    log_sigma_tp1 = head[:, x_dim:2 * x_dim]
    h_n = state[0:1, :H]
    c_n = state[1:2, :H]
    return mu_tp1, log_sigma_tp1, (h_n, c_n)


# --------------------------- pure-JAX reference -------------------------------
def reference_forward(mu_t, sigma_t, a_t, params, last_state=None):
    xa = jnp.concatenate([mu_t, sigma_t, a_t], axis=1)
    H = params["w_hh"].shape[0]
    if last_state is None:
        h0 = jnp.zeros(H, jnp.float32)
        c0 = jnp.zeros(H, jnp.float32)
    else:
        h0 = last_state[0][0]
        c0 = last_state[1][0]

    def step(carry, x):
        h, c = carry
        gates = x @ params["w_ih"] + params["b"][0] + h @ params["w_hh"]
        i = jax.nn.sigmoid(gates[0 * H:1 * H])
        f = jax.nn.sigmoid(gates[1 * H:2 * H])
        g = jnp.tanh(gates[2 * H:3 * H])
        o = jax.nn.sigmoid(gates[3 * H:4 * H])
        c = f * c + i * g
        h = o * jnp.tanh(c)
        return (h, c), h

    (h_n, c_n), hs = lax.scan(step, (h0, c0), xa)
    out = jnp.maximum(hs @ params["w1"] + params["b1"], 0.0)
    mu = out @ params["w_mu"] + params["b_mu"]
    sig = jnp.maximum(out @ params["w_sig"] + params["b_sig"], 0.0)
    return mu, sig, h_n[None, :], c_n[None, :]


# --------------------------------- main ---------------------------------------
def make_params(key, x_dim, a_dim, cell_dim, linear_dim):
    input_dim = 2 * x_dim + a_dim
    ks = jax.random.split(key, 10)
    s = 0.1
    return {
        # LSTM (PyTorch weight_ih_l0 is (4H, in); we store transposed (in, 4H)).
        "w_ih": s * jax.random.normal(ks[0], (input_dim, 4 * cell_dim), jnp.float32),
        "w_hh": s * jax.random.normal(ks[1], (cell_dim, 4 * cell_dim), jnp.float32),
        # combined b_ih + b_hh
        "b":    s * jax.random.normal(ks[2], (1, 4 * cell_dim), jnp.float32),
        # nonlinear_layers: Linear(cell_dim, linear_dim[0]) + ReLU
        "w1":   s * jax.random.normal(ks[3], (cell_dim, linear_dim[0]), jnp.float32),
        "b1":   s * jax.random.normal(ks[4], (1, linear_dim[0]), jnp.float32),
        # heads
        "w_mu":  s * jax.random.normal(ks[5], (linear_dim[-1], x_dim), jnp.float32),
        "b_mu":  s * jax.random.normal(ks[6], (1, x_dim), jnp.float32),
        "w_sig": s * jax.random.normal(ks[7], (linear_dim[-1], x_dim), jnp.float32),
        "b_sig": s * jax.random.normal(ks[8], (1, x_dim), jnp.float32),
    }


if __name__ == "__main__":
    x_dim, a_dim = 16, 4
    cell_dim, linear_dim = 32, (32,)
    T = 8   # leading axis of mu/sigma/a; recurred over by the (unbatched) LSTM

    key = jax.random.PRNGKey(0)
    k_p, k_mu, k_sig, k_a = jax.random.split(key, 4)
    params = make_params(k_p, x_dim, a_dim, cell_dim, linear_dim)
    kparams = prepare_kernel_params(params, x_dim, a_dim)

    mu_t = jax.random.normal(k_mu, (T, x_dim), jnp.float32)
    sigma_t = jnp.abs(jax.random.normal(k_sig, (T, x_dim), jnp.float32))
    a_t = jax.random.normal(k_a, (T, a_dim), jnp.float32)

    # Tolerance is loosened vs the previous f32-only kernel because the
    # recurrent (1,4H)@(4H,4H) dot now runs with bf16 operands (f32 accumulate);
    # observed error vs the pure-f32 reference is O(1e-3) at these sizes.
    ATOL, RTOL = 2e-2, 2e-2

    # stateless call
    mu_tp1, log_sigma_tp1, (h_n, c_n) = forward_model_recurrent_sigma(
        mu_t, sigma_t, a_t, kparams, last_state=None)
    jax.block_until_ready((mu_tp1, log_sigma_tp1, h_n, c_n))

    r_mu, r_sig, r_h, r_c = reference_forward(mu_t, sigma_t, a_t, params)
    assert jnp.allclose(mu_tp1, r_mu, atol=ATOL, rtol=RTOL)
    assert jnp.allclose(log_sigma_tp1, r_sig, atol=ATOL, rtol=RTOL)
    assert jnp.allclose(h_n, r_h, atol=ATOL, rtol=RTOL)
    assert jnp.allclose(c_n, r_c, atol=ATOL, rtol=RTOL)

    # stateful call (feed last_state back in)
    mu2, sig2, (h2, c2) = forward_model_recurrent_sigma(
        mu_t, sigma_t, a_t, kparams, last_state=(h_n, c_n))
    jax.block_until_ready((mu2, sig2, h2, c2))
    r_mu2, r_sig2, r_h2, r_c2 = reference_forward(
        mu_t, sigma_t, a_t, params, last_state=(r_h, r_c))
    assert jnp.allclose(mu2, r_mu2, atol=ATOL, rtol=RTOL)
    assert jnp.allclose(sig2, r_sig2, atol=ATOL, rtol=RTOL)
    assert jnp.allclose(h2, r_h2, atol=ATOL, rtol=RTOL)
    assert jnp.allclose(c2, r_c2, atol=ATOL, rtol=RTOL)

    print("KERNEL_OK")
</pallas_src>

<mosaic_0001>
module attributes {stable_mosaic.version = 11 : i64} {
  func.func @fwd_kernel(%arg0: memref<8x16xf32, #tpu.memory_space<vmem>>, %arg1: memref<8x16xf32, #tpu.memory_space<vmem>>, %arg2: memref<8x4xf32, #tpu.memory_space<vmem>>, %arg3: memref<16x128xf32, #tpu.memory_space<vmem>>, %arg4: memref<16x128xf32, #tpu.memory_space<vmem>>, %arg5: memref<4x128xf32, #tpu.memory_space<vmem>>, %arg6: memref<1x128xf32, #tpu.memory_space<vmem>>, %arg7: memref<128x128xf32, #tpu.memory_space<vmem>>, %arg8: memref<128x32xf32, #tpu.memory_space<vmem>>, %arg9: memref<1x32xf32, #tpu.memory_space<vmem>>, %arg10: memref<32x128xf32, #tpu.memory_space<vmem>>, %arg11: memref<1x128xf32, #tpu.memory_space<vmem>>, %arg12: memref<2x128xf32, #tpu.memory_space<vmem>>, %arg13: memref<8x128xf32, #tpu.memory_space<vmem>>, %arg14: memref<2x128xf32, #tpu.memory_space<vmem>>) attributes {dimension_semantics = [], scalar_prefetch = 0 : i64, scratch_operands = 0 : i64, tpu.core_type = #tpu.core_type<tc>} {
    %0 = tpu.iota {dimensions = array<i32: 1>} : vector<1x128xi32>
    %c64_i32 = arith.constant 64 : i32
    %1 = vector.broadcast %c64_i32 : i32 to vector<1x128xi32>
    %2 = arith.cmpi sge, %0, %1 : vector<1x128xi32>
    %c96_i32 = arith.constant 96 : i32
    %3 = vector.broadcast %c96_i32 : i32 to vector<1x128xi32>
    %4 = arith.cmpi slt, %0, %3 : vector<1x128xi32>
    %5 = arith.andi %2, %4 : vector<1x128xi1>
    %cst = arith.constant 1.000000e+00 : f32
    %cst_0 = arith.constant 5.000000e-01 : f32
    %6 = vector.broadcast %cst : f32 to vector<1x128xf32>
    %7 = vector.broadcast %cst_0 : f32 to vector<1x128xf32>
    %8 = arith.select %5, %6, %7 : vector<1x128xi1>, vector<1x128xf32>
    %cst_1 = arith.constant 0.000000e+00 : f32
    %cst_2 = arith.constant 5.000000e-01 : f32
    %9 = vector.broadcast %cst_1 : f32 to vector<1x128xf32>
    %10 = vector.broadcast %cst_2 : f32 to vector<1x128xf32>
    %11 = arith.select %5, %9, %10 : vector<1x128xi1>, vector<1x128xf32>
    %c32_i32 = arith.constant 32 : i32
    %12 = vector.broadcast %c32_i32 : i32 to vector<1x128xi32>
    %13 = arith.cmpi slt, %0, %12 : vector<1x128xi32>
    %14 = arith.extui %13 : vector<1x128xi1> to vector<1x128xi32>
    %15 = arith.sitofp %14 : vector<1x128xi32> to vector<1x128xf32>
    %16 = tpu.iota {dimensions = array<i32: 1>} : vector<1x128xi32>
    %c16_i32 = arith.constant 16 : i32
    %17 = vector.broadcast %c16_i32 : i32 to vector<1x128xi32>
    %18 = arith.cmpi sge, %16, %17 : vector<1x128xi32>
    %c0 = arith.constant 0 : index
    %c0_3 = arith.constant 0 : index
    %19 = vector.load %arg0[%c0, %c0_3] : memref<8x16xf32, #tpu.memory_space<vmem>>, vector<8x16xf32>
    %c0_4 = arith.constant 0 : index
    %c0_5 = arith.constant 0 : index
    %20 = vector.load %arg3[%c0_4, %c0_5] : memref<16x128xf32, #tpu.memory_space<vmem>>, vector<16x128xf32>
    %cst_6 = arith.constant dense<0.000000e+00> : vector<8x128xf32>
    %21 = tpu.matmul %19, %20, %cst_6 {dimension_numbers = #tpu.dot_dimension_numbers<[1], [0], [0], [1], [0, 0, 1, 1], [], []>} : vector<8x16xf32>, vector<16x128xf32>, vector<8x128xf32> -> vector<8x128xf32>
    %c0_7 = arith.constant 0 : index
    %c0_8 = arith.constant 0 : index
    %22 = vector.load %arg1[%c0_7, %c0_8] : memref<8x16xf32, #tpu.memory_space<vmem>>, vector<8x16xf32>
    %c0_9 = arith.constant 0 : index
    %c0_10 = arith.constant 0 : index
    %23 = vector.load %arg4[%c0_9, %c0_10] : memref<16x128xf32, #tpu.memory_space<vmem>>, vector<16x128xf32>
    %cst_11 = arith.constant dense<0.000000e+00> : vector<8x128xf32>
    %24 = tpu.matmul %22, %23, %cst_11 {dimension_numbers = #tpu.dot_dimension_numbers<[1], [0], [0], [1], [0, 0, 1, 1], [], []>} : vector<8x16xf32>, vector<16x128xf32>, vector<8x128xf32> -> vector<8x128xf32>
    %25 = arith.addf %21, %24 : vector<8x128xf32>
    %c0_12 = arith.constant 0 : index
    %c0_13 = arith.constant 0 : index
    %26 = vector.load %arg2[%c0_12, %c0_13] : memref<8x4xf32, #tpu.memory_space<vmem>>, vector<8x4xf32>
    %c0_14 = arith.constant 0 : index
    %c0_15 = arith.constant 0 : index
    %27 = vector.load %arg5[%c0_14, %c0_15] : memref<4x128xf32, #tpu.memory_space<vmem>>, vector<4x128xf32>
    %cst_16 = arith.constant dense<0.000000e+00> : vector<8x128xf32>
    %28 = tpu.matmul %26, %27, %cst_16 {dimension_numbers = #tpu.dot_dimension_numbers<[1], [0], [0], [1], [0, 0, 1, 1], [], []>} : vector<8x4xf32>, vector<4x128xf32>, vector<8x128xf32> -> vector<8x128xf32>
    %29 = arith.addf %25, %28 : vector<8x128xf32>
    %c0_17 = arith.constant 0 : index
    %c0_18 = arith.constant 0 : index
    %30 = vector.load %arg6[%c0_17, %c0_18] : memref<1x128xf32, #tpu.memory_space<vmem>>, vector<1x128xf32>
    %31 = vector.broadcast %30 : vector<1x128xf32> to vector<8x128xf32>
    %32 = arith.addf %29, %31 : vector<8x128xf32>
    %c0_19 = arith.constant 0 : index
    %c0_20 = arith.constant 0 : index
    %33 = vector.load %arg7[%c0_19, %c0_20] : memref<128x128xf32, #tpu.memory_space<vmem>>, vector<128x128xf32>
    %34 = arith.truncf %33 : vector<128x128xf32> to vector<128x128xbf16>
    %c0_21 = arith.constant 0 : index
    %c0_22 = arith.constant 0 : index
    %35 = vector.load %arg8[%c0_21, %c0_22] : memref<128x32xf32, #tpu.memory_space<vmem>>, vector<128x32xf32>
    %c0_23 = arith.constant 0 : index
    %c0_24 = arith.constant 0 : index
    %36 = vector.load %arg9[%c0_23, %c0_24] : memref<1x32xf32, #tpu.memory_space<vmem>>, vector<1x32xf32>
    %c0_25 = arith.constant 0 : index
    %c0_26 = arith.constant 0 : index
    %37 = vector.load %arg10[%c0_25, %c0_26] : memref<32x128xf32, #tpu.memory_space<vmem>>, vector<32x128xf32>
    %c0_27 = arith.constant 0 : index
    %c0_28 = arith.constant 0 : index
    %38 = vector.load %arg11[%c0_27, %c0_28] : memref<1x128xf32, #tpu.memory_space<vmem>>, vector<1x128xf32>
    %c0_29 = arith.constant 0 : index
    %c0_30 = arith.constant 0 : index
    %39 = vector.load %arg12[%c0_29, %c0_30] : memref<2x128xf32, #tpu.memory_space<vmem>>, vector<1x128xf32>
    %c1 = arith.constant 1 : index
    %c0_31 = arith.constant 0 : index
    %40 = vector.load %arg12[%c1, %c0_31] : memref<2x128xf32, #tpu.memory_space<vmem>>, vector<1x128xf32>
    %41 = vector.extract_strided_slice %32 {offsets = [0, 0], sizes = [1, 128], strides = [1, 1]} : vector<8x128xf32> to vector<1x128xf32>
    %42 = arith.truncf %39 : vector<1x128xf32> to vector<1x128xbf16>
    %cst_32 = arith.constant dense<0.000000e+00> : vector<1x128xf32>
    %43 = tpu.matmul %42, %34, %cst_32 {dimension_numbers = #tpu.dot_dimension_numbers<[1], [0], [0], [1], [0, 0, 1, 1], [], []>} : vector<1x128xbf16>, vector<128x128xbf16>, vector<1x128xf32> -> vector<1x128xf32>
    %44 = arith.addf %41, %43 : vector<1x128xf32>
    %45 = math.tanh %44 : vector<1x128xf32>
    %46 = arith.mulf %8, %45 : vector<1x128xf32>
    %47 = arith.addf %46, %11 : vector<1x128xf32>
    %c96_i32_33 = arith.constant 96 : i32
    %48 = tpu.dynamic_rotate %47 by %c96_i32_33 dim 1 : vector<1x128xf32>, i32 -> vector<1x128xf32>
    %c64_i32_34 = arith.constant 64 : i32
    %49 = tpu.dynamic_rotate %47 by %c64_i32_34 dim 1 : vector<1x128xf32>, i32 -> vector<1x128xf32>
    %c32_i32_35 = arith.constant 32 : i32
    %50 = tpu.dynamic_rotate %47 by %c32_i32_35 dim 1 : vector<1x128xf32>, i32 -> vector<1x128xf32>
    %51 = arith.mulf %48, %40 : vector<1x128xf32>
    %52 = arith.mulf %47, %49 : vector<1x128xf32>
    %53 = arith.addf %51, %52 : vector<1x128xf32>
    %54 = math.tanh %53 : vector<1x128xf32>
    %55 = arith.mulf %50, %54 : vector<1x128xf32>
    %cst_36 = arith.constant dense<0.000000e+00> : vector<1x32xf32>
    %56 = tpu.matmul %55, %35, %cst_36 {dimension_numbers = #tpu.dot_dimension_numbers<[1], [0], [0], [1], [0, 0, 1, 1], [], []>} : vector<1x128xf32>, vector<128x32xf32>, vector<1x32xf32> -> vector<1x32xf32>
    %57 = arith.addf %56, %36 : vector<1x32xf32>
    %cst_37 = arith.constant 0.000000e+00 : f32
    %58 = vector.broadcast %cst_37 : f32 to vector<1x32xf32>
    %59 = arith.maximumf %57, %58 : vector<1x32xf32>
    %cst_38 = arith.constant dense<0.000000e+00> : vector<1x128xf32>
    %60 = tpu.matmul %59, %37, %cst_38 {dimension_numbers = #tpu.dot_dimension_numbers<[1], [0], [0], [1], [0, 0, 1, 1], [], []>} : vector<1x32xf32>, vector<32x128xf32>, vector<1x128xf32> -> vector<1x128xf32>
    %61 = arith.addf %60, %38 : vector<1x128xf32>
    %cst_39 = arith.constant 0.000000e+00 : f32
    %62 = vector.broadcast %cst_39 : f32 to vector<1x128xf32>
    %63 = arith.maximumf %61, %62 : vector<1x128xf32>
    %64 = arith.select %18, %63, %61 : vector<1x128xi1>, vector<1x128xf32>
    %c0_40 = arith.constant 0 : index
    %c0_41 = arith.constant 0 : index
    %65 = vector.load %arg13[%c0_40, %c0_41] : memref<8x128xf32, #tpu.memory_space<vmem>>, vector<1x128xf32>
    tpu.vector_store %arg13[%c0_40, %c0_41], %64 {strides = array<i32>} : memref<8x128xf32, #tpu.memory_space<vmem>>, vector<1x128xf32>,
    %66 = vector.extract_strided_slice %32 {offsets = [1, 0], sizes = [1, 128], strides = [1, 1]} : vector<8x128xf32> to vector<1x128xf32>
    %67 = arith.truncf %55 : vector<1x128xf32> to vector<1x128xbf16>
    %cst_42 = arith.constant dense<0.000000e+00> : vector<1x128xf32>
    %68 = tpu.matmul %67, %34, %cst_42 {dimension_numbers = #tpu.dot_dimension_numbers<[1], [0], [0], [1], [0, 0, 1, 1], [], []>} : vector<1x128xbf16>, vector<128x128xbf16>, vector<1x128xf32> -> vector<1x128xf32>
    %69 = arith.addf %66, %68 : vector<1x128xf32>
    %70 = math.tanh %69 : vector<1x128xf32>
    %71 = arith.mulf %8, %70 : vector<1x128xf32>
    %72 = arith.addf %71, %11 : vector<1x128xf32>
    %c96_i32_43 = arith.constant 96 : i32
    %73 = tpu.dynamic_rotate %72 by %c96_i32_43 dim 1 : vector<1x128xf32>, i32 -> vector<1x128xf32>
    %c64_i32_44 = arith.constant 64 : i32
    %74 = tpu.dynamic_rotate %72 by %c64_i32_44 dim 1 : vector<1x128xf32>, i32 -> vector<1x128xf32>
    %c32_i32_45 = arith.constant 32 : i32
    %75 = tpu.dynamic_rotate %72 by %c32_i32_45 dim 1 : vector<1x128xf32>, i32 -> vector<1x128xf32>
    %76 = arith.mulf %73, %53 : vector<1x128xf32>
    %77 = arith.mulf %72, %74 : vector<1x128xf32>
    %78 = arith.addf %76, %77 : vector<1x128xf32>
    %79 = math.tanh %78 : vector<1x128xf32>
    %80 = arith.mulf %75, %79 : vector<1x128xf32>
    %cst_46 = arith.constant dense<0.000000e+00> : vector<1x32xf32>
    %81 = tpu.matmul %80, %35, %cst_46 {dimension_numbers = #tpu.dot_dimension_numbers<[1], [0], [0], [1], [0, 0, 1, 1], [], []>} : vector<1x128xf32>, vector<128x32xf32>, vector<1x32xf32> -> vector<1x32xf32>
    %82 = arith.addf %81, %36 : vector<1x32xf32>
    %cst_47 = arith.constant 0.000000e+00 : f32
    %83 = vector.broadcast %cst_47 : f32 to vector<1x32xf32>
    %84 = arith.maximumf %82, %83 : vector<1x32xf32>
    %cst_48 = arith.constant dense<0.000000e+00> : vector<1x128xf32>
    %85 = tpu.matmul %84, %37, %cst_48 {dimension_numbers = #tpu.dot_dimension_numbers<[1], [0], [0], [1], [0, 0, 1, 1], [], []>} : vector<1x32xf32>, vector<32x128xf32>, vector<1x128xf32> -> vector<1x128xf32>
    %86 = arith.addf %85, %38 : vector<1x128xf32>
    %cst_49 = arith.constant 0.000000e+00 : f32
    %87 = vector.broadcast %cst_49 : f32 to vector<1x128xf32>
    %88 = arith.maximumf %86, %87 : vector<1x128xf32>
    %89 = arith.select %18, %88, %86 : vector<1x128xi1>, vector<1x128xf32>
    %c1_50 = arith.constant 1 : index
    %c0_51 = arith.constant 0 : index
    %90 = vector.load %arg13[%c1_50, %c0_51] : memref<8x128xf32, #tpu.memory_space<vmem>>, vector<1x128xf32>
    tpu.vector_store %arg13[%c1_50, %c0_51], %89 {strides = array<i32>} : memref<8x128xf32, #tpu.memory_space<vmem>>, vector<1x128xf32>,
    %91 = vector.extract_strided_slice %32 {offsets = [2, 0], sizes = [1, 128], strides = [1, 1]} : vector<8x128xf32> to vector<1x128xf32>
    %92 = arith.truncf %80 : vector<1x128xf32> to vector<1x128xbf16>
    %cst_52 = arith.constant dense<0.000000e+00> : vector<1x128xf32>
    %93 = tpu.matmul %92, %34, %cst_52 {dimension_numbers = #tpu.dot_dimension_numbers<[1], [0], [0], [1], [0, 0, 1, 1], [], []>} : vector<1x128xbf16>, vector<128x128xbf16>, vector<1x128xf32> -> vector<1x128xf32>
    %94 = arith.addf %91, %93 : vector<1x128xf32>
    %95 = math.tanh %94 : vector<1x128xf32>
    %96 = arith.mulf %8, %95 : vector<1x128xf32>
    %97 = arith.addf %96, %11 : vector<1x128xf32>
    %c96_i32_53 = arith.constant 96 : i32
    %98 = tpu.dynamic_rotate %97 by %c96_i32_53 dim 1 : vector<1x128xf32>, i32 -> vector<1x128xf32>
    %c64_i32_54 = arith.constant 64 : i32
    %99 = tpu.dynamic_rotate %97 by %c64_i32_54 dim 1 : vector<1x128xf32>, i32 -> vector<1x128xf32>
    %c32_i32_55 = arith.constant 32 : i32
    %100 = tpu.dynamic_rotate %97 by %c32_i32_55 dim 1 : vector<1x128xf32>, i32 -> vector<1x128xf32>
    %101 = arith.mulf %98, %78 : vector<1x128xf32>
    %102 = arith.mulf %97, %99 : vector<1x128xf32>
    %103 = arith.addf %101, %102 : vector<1x128xf32>
    %104 = math.tanh %103 : vector<1x128xf32>
    %105 = arith.mulf %100, %104 : vector<1x128xf32>
    %cst_56 = arith.constant dense<0.000000e+00> : vector<1x32xf32>
    %106 = tpu.matmul %105, %35, %cst_56 {dimension_numbers = #tpu.dot_dimension_numbers<[1], [0], [0], [1], [0, 0, 1, 1], [], []>} : vector<1x128xf32>, vector<128x32xf32>, vector<1x32xf32> -> vector<1x32xf32>
    %107 = arith.addf %106, %36 : vector<1x32xf32>
    %cst_57 = arith.constant 0.000000e+00 : f32
    %108 = vector.broadcast %cst_57 : f32 to vector<1x32xf32>
    %109 = arith.maximumf %107, %108 : vector<1x32xf32>
    %cst_58 = arith.constant dense<0.000000e+00> : vector<1x128xf32>
    %110 = tpu.matmul %109, %37, %cst_58 {dimension_numbers = #tpu.dot_dimension_numbers<[1], [0], [0], [1], [0, 0, 1, 1], [], []>} : vector<1x32xf32>, vector<32x128xf32>, vector<1x128xf32> -> vector<1x128xf32>
    %111 = arith.addf %110, %38 : vector<1x128xf32>
    %cst_59 = arith.constant 0.000000e+00 : f32
    %112 = vector.broadcast %cst_59 : f32 to vector<1x128xf32>
    %113 = arith.maximumf %111, %112 : vector<1x128xf32>
    %114 = arith.select %18, %113, %111 : vector<1x128xi1>, vector<1x128xf32>
    %c2 = arith.constant 2 : index
    %c0_60 = arith.constant 0 : index
    %115 = vector.load %arg13[%c2, %c0_60] : memref<8x128xf32, #tpu.memory_space<vmem>>, vector<1x128xf32>
    tpu.vector_store %arg13[%c2, %c0_60], %114 {strides = array<i32>} : memref<8x128xf32, #tpu.memory_space<vmem>>, vector<1x128xf32>,
    %116 = vector.extract_strided_slice %32 {offsets = [3, 0], sizes = [1, 128], strides = [1, 1]} : vector<8x128xf32> to vector<1x128xf32>
    %117 = arith.truncf %105 : vector<1x128xf32> to vector<1x128xbf16>
    %cst_61 = arith.constant dense<0.000000e+00> : vector<1x128xf32>
    %118 = tpu.matmul %117, %34, %cst_61 {dimension_numbers = #tpu.dot_dimension_numbers<[1], [0], [0], [1], [0, 0, 1, 1], [], []>} : vector<1x128xbf16>, vector<128x128xbf16>, vector<1x128xf32> -> vector<1x128xf32>
    %119 = arith.addf %116, %118 : vector<1x128xf32>
    %120 = math.tanh %119 : vector<1x128xf32>
    %121 = arith.mulf %8, %120 : vector<1x128xf32>
    %122 = arith.addf %121, %11 : vector<1x128xf32>
    %c96_i32_62 = arith.constant 96 : i32
    %123 = tpu.dynamic_rotate %122 by %c96_i32_62 dim 1 : vector<1x128xf32>, i32 -> vector<1x128xf32>
    %c64_i32_63 = arith.constant 64 : i32
    %124 = tpu.dynamic_rotate %122 by %c64_i32_63 dim 1 : vector<1x128xf32>, i32 -> vector<1x128xf32>
    %c32_i32_64 = arith.constant 32 : i32
    %125 = tpu.dynamic_rotate %122 by %c32_i32_64 dim 1 : vector<1x128xf32>, i32 -> vector<1x128xf32>
    %126 = arith.mulf %123, %103 : vector<1x128xf32>
    %127 = arith.mulf %122, %124 : vector<1x128xf32>
    %128 = arith.addf %126, %127 : vector<1x128xf32>
    %129 = math.tanh %128 : vector<1x128xf32>
    %130 = arith.mulf %125, %129 : vector<1x128xf32>
    %cst_65 = arith.constant dense<0.000000e+00> : vector<1x32xf32>
    %131 = tpu.matmul %130, %35, %cst_65 {dimension_numbers = #tpu.dot_dimension_numbers<[1], [0], [0], [1], [0, 0, 1, 1], [], []>} : vector<1x128xf32>, vector<128x32xf32>, vector<1x32xf32> -> vector<1x32xf32>
    %132 = arith.addf %131, %36 : vector<1x32xf32>
    %cst_66 = arith.constant 0.000000e+00 : f32
    %133 = vector.broadcast %cst_66 : f32 to vector<1x32xf32>
    %134 = arith.maximumf %132, %133 : vector<1x32xf32>
    %cst_67 = arith.constant dense<0.000000e+00> : vector<1x128xf32>
    %135 = tpu.matmul %134, %37, %cst_67 {dimension_numbers = #tpu.dot_dimension_numbers<[1], [0], [0], [1], [0, 0, 1, 1], [], []>} : vector<1x32xf32>, vector<32x128xf32>, vector<1x128xf32> -> vector<1x128xf32>
    %136 = arith.addf %135, %38 : vector<1x128xf32>
    %cst_68 = arith.constant 0.000000e+00 : f32
    %137 = vector.broadcast %cst_68 : f32 to vector<1x128xf32>
    %138 = arith.maximumf %136, %137 : vector<1x128xf32>
    %139 = arith.select %18, %138, %136 : vector<1x128xi1>, vector<1x128xf32>
    %c3 = arith.constant 3 : index
    %c0_69 = arith.constant 0 : index
    %140 = vector.load %arg13[%c3, %c0_69] : memref<8x128xf32, #tpu.memory_space<vmem>>, vector<1x128xf32>
    tpu.vector_store %arg13[%c3, %c0_69], %139 {strides = array<i32>} : memref<8x128xf32, #tpu.memory_space<vmem>>, vector<1x128xf32>,
    %141 = vector.extract_strided_slice %32 {offsets = [4, 0], sizes = [1, 128], strides = [1, 1]} : vector<8x128xf32> to vector<1x128xf32>
    %142 = arith.truncf %130 : vector<1x128xf32> to vector<1x128xbf16>
    %cst_70 = arith.constant dense<0.000000e+00> : vector<1x128xf32>
    %143 = tpu.matmul %142, %34, %cst_70 {dimension_numbers = #tpu.dot_dimension_numbers<[1], [0], [0], [1], [0, 0, 1, 1], [], []>} : vector<1x128xbf16>, vector<128x128xbf16>, vector<1x128xf32> -> vector<1x128xf32>
    %144 = arith.addf %141, %143 : vector<1x128xf32>
    %145 = math.tanh %144 : vector<1x128xf32>
    %146 = arith.mulf %8, %145 : vector<1x128xf32>
    %147 = arith.addf %146, %11 : vector<1x128xf32>
    %c96_i32_71 = arith.constant 96 : i32
    %148 = tpu.dynamic_rotate %147 by %c96_i32_71 dim 1 : vector<1x128xf32>, i32 -> vector<1x128xf32>
    %c64_i32_72 = arith.constant 64 : i32
    %149 = tpu.dynamic_rotate %147 by %c64_i32_72 dim 1 : vector<1x128xf32>, i32 -> vector<1x128xf32>
    %c32_i32_73 = arith.constant 32 : i32
    %150 = tpu.dynamic_rotate %147 by %c32_i32_73 dim 1 : vector<1x128xf32>, i32 -> vector<1x128xf32>
    %151 = arith.mulf %148, %128 : vector<1x128xf32>
    %152 = arith.mulf %147, %149 : vector<1x128xf32>
    %153 = arith.addf %151, %152 : vector<1x128xf32>
    %154 = math.tanh %153 : vector<1x128xf32>
    %155 = arith.mulf %150, %154 : vector<1x128xf32>
    %cst_74 = arith.constant dense<0.000000e+00> : vector<1x32xf32>
    %156 = tpu.matmul %155, %35, %cst_74 {dimension_numbers = #tpu.dot_dimension_numbers<[1], [0], [0], [1], [0, 0, 1, 1], [], []>} : vector<1x128xf32>, vector<128x32xf32>, vector<1x32xf32> -> vector<1x32xf32>
    %157 = arith.addf %156, %36 : vector<1x32xf32>
    %cst_75 = arith.constant 0.000000e+00 : f32
    %158 = vector.broadcast %cst_75 : f32 to vector<1x32xf32>
    %159 = arith.maximumf %157, %158 : vector<1x32xf32>
    %cst_76 = arith.constant dense<0.000000e+00> : vector<1x128xf32>
    %160 = tpu.matmul %159, %37, %cst_76 {dimension_numbers = #tpu.dot_dimension_numbers<[1], [0], [0], [1], [0, 0, 1, 1], [], []>} : vector<1x32xf32>, vector<32x128xf32>, vector<1x128xf32> -> vector<1x128xf32>
    %161 = arith.addf %160, %38 : vector<1x128xf32>
    %cst_77 = arith.constant 0.000000e+00 : f32
    %162 = vector.broadcast %cst_77 : f32 to vector<1x128xf32>
    %163 = arith.maximumf %161, %162 : vector<1x128xf32>
    %164 = arith.select %18, %163, %161 : vector<1x128xi1>, vector<1x128xf32>
    %c4 = arith.constant 4 : index
    %c0_78 = arith.constant 0 : index
    %165 = vector.load %arg13[%c4, %c0_78] : memref<8x128xf32, #tpu.memory_space<vmem>>, vector<1x128xf32>
    tpu.vector_store %arg13[%c4, %c0_78], %164 {strides = array<i32>} : memref<8x128xf32, #tpu.memory_space<vmem>>, vector<1x128xf32>,
    %166 = vector.extract_strided_slice %32 {offsets = [5, 0], sizes = [1, 128], strides = [1, 1]} : vector<8x128xf32> to vector<1x128xf32>
    %167 = arith.truncf %155 : vector<1x128xf32> to vector<1x128xbf16>
    %cst_79 = arith.constant dense<0.000000e+00> : vector<1x128xf32>
    %168 = tpu.matmul %167, %34, %cst_79 {dimension_numbers = #tpu.dot_dimension_numbers<[1], [0], [0], [1], [0, 0, 1, 1], [], []>} : vector<1x128xbf16>, vector<128x128xbf16>, vector<1x128xf32> -> vector<1x128xf32>
    %169 = arith.addf %166, %168 : vector<1x128xf32>
    %170 = math.tanh %169 : vector<1x128xf32>
    %171 = arith.mulf %8, %170 : vector<1x128xf32>
    %172 = arith.addf %171, %11 : vector<1x128xf32>
    %c96_i32_80 = arith.constant 96 : i32
    %173 = tpu.dynamic_rotate %172 by %c96_i32_80 dim 1 : vector<1x128xf32>, i32 -> vector<1x128xf32>
    %c64_i32_81 = arith.constant 64 : i32
    %174 = tpu.dynamic_rotate %172 by %c64_i32_81 dim 1 : vector<1x128xf32>, i32 -> vector<1x128xf32>
    %c32_i32_82 = arith.constant 32 : i32
    %175 = tpu.dynamic_rotate %172 by %c32_i32_82 dim 1 : vector<1x128xf32>, i32 -> vector<1x128xf32>
    %176 = arith.mulf %173, %153 : vector<1x128xf32>
    %177 = arith.mulf %172, %174 : vector<1x128xf32>
    %178 = arith.addf %176, %177 : vector<1x128xf32>
    %179 = math.tanh %178 : vector<1x128xf32>
    %180 = arith.mulf %175, %179 : vector<1x128xf32>
    %cst_83 = arith.constant dense<0.000000e+00> : vector<1x32xf32>
    %181 = tpu.matmul %180, %35, %cst_83 {dimension_numbers = #tpu.dot_dimension_numbers<[1], [0], [0], [1], [0, 0, 1, 1], [], []>} : vector<1x128xf32>, vector<128x32xf32>, vector<1x32xf32> -> vector<1x32xf32>
    %182 = arith.addf %181, %36 : vector<1x32xf32>
    %cst_84 = arith.constant 0.000000e+00 : f32
    %183 = vector.broadcast %cst_84 : f32 to vector<1x32xf32>
    %184 = arith.maximumf %182, %183 : vector<1x32xf32>
    %cst_85 = arith.constant dense<0.000000e+00> : vector<1x128xf32>
    %185 = tpu.matmul %184, %37, %cst_85 {dimension_numbers = #tpu.dot_dimension_numbers<[1], [0], [0], [1], [0, 0, 1, 1], [], []>} : vector<1x32xf32>, vector<32x128xf32>, vector<1x128xf32> -> vector<1x128xf32>
    %186 = arith.addf %185, %38 : vector<1x128xf32>
    %cst_86 = arith.constant 0.000000e+00 : f32
    %187 = vector.broadcast %cst_86 : f32 to vector<1x128xf32>
    %188 = arith.maximumf %186, %187 : vector<1x128xf32>
    %189 = arith.select %18, %188, %186 : vector<1x128xi1>, vector<1x128xf32>
    %c5 = arith.constant 5 : index
    %c0_87 = arith.constant 0 : index
    %190 = vector.load %arg13[%c5, %c0_87] : memref<8x128xf32, #tpu.memory_space<vmem>>, vector<1x128xf32>
    tpu.vector_store %arg13[%c5, %c0_87], %189 {strides = array<i32>} : memref<8x128xf32, #tpu.memory_space<vmem>>, vector<1x128xf32>,
    %191 = vector.extract_strided_slice %32 {offsets = [6, 0], sizes = [1, 128], strides = [1, 1]} : vector<8x128xf32> to vector<1x128xf32>
    %192 = arith.truncf %180 : vector<1x128xf32> to vector<1x128xbf16>
    %cst_88 = arith.constant dense<0.000000e+00> : vector<1x128xf32>
    %193 = tpu.matmul %192, %34, %cst_88 {dimension_numbers = #tpu.dot_dimension_numbers<[1], [0], [0], [1], [0, 0, 1, 1], [], []>} : vector<1x128xbf16>, vector<128x128xbf16>, vector<1x128xf32> -> vector<1x128xf32>
    %194 = arith.addf %191, %193 : vector<1x128xf32>
    %195 = math.tanh %194 : vector<1x128xf32>
    %196 = arith.mulf %8, %195 : vector<1x128xf32>
    %197 = arith.addf %196, %11 : vector<1x128xf32>
    %c96_i32_89 = arith.constant 96 : i32
    %198 = tpu.dynamic_rotate %197 by %c96_i32_89 dim 1 : vector<1x128xf32>, i32 -> vector<1x128xf32>
    %c64_i32_90 = arith.constant 64 : i32
    %199 = tpu.dynamic_rotate %197 by %c64_i32_90 dim 1 : vector<1x128xf32>, i32 -> vector<1x128xf32>
    %c32_i32_91 = arith.constant 32 : i32
    %200 = tpu.dynamic_rotate %197 by %c32_i32_91 dim 1 : vector<1x128xf32>, i32 -> vector<1x128xf32>
    %201 = arith.mulf %198, %178 : vector<1x128xf32>
    %202 = arith.mulf %197, %199 : vector<1x128xf32>
    %203 = arith.addf %201, %202 : vector<1x128xf32>
    %204 = math.tanh %203 : vector<1x128xf32>
    %205 = arith.mulf %200, %204 : vector<1x128xf32>
    %cst_92 = arith.constant dense<0.000000e+00> : vector<1x32xf32>
    %206 = tpu.matmul %205, %35, %cst_92 {dimension_numbers = #tpu.dot_dimension_numbers<[1], [0], [0], [1], [0, 0, 1, 1], [], []>} : vector<1x128xf32>, vector<128x32xf32>, vector<1x32xf32> -> vector<1x32xf32>
    %207 = arith.addf %206, %36 : vector<1x32xf32>
    %cst_93 = arith.constant 0.000000e+00 : f32
    %208 = vector.broadcast %cst_93 : f32 to vector<1x32xf32>
    %209 = arith.maximumf %207, %208 : vector<1x32xf32>
    %cst_94 = arith.constant dense<0.000000e+00> : vector<1x128xf32>
    %210 = tpu.matmul %209, %37, %cst_94 {dimension_numbers = #tpu.dot_dimension_numbers<[1], [0], [0], [1], [0, 0, 1, 1], [], []>} : vector<1x32xf32>, vector<32x128xf32>, vector<1x128xf32> -> vector<1x128xf32>
    %211 = arith.addf %210, %38 : vector<1x128xf32>
    %cst_95 = arith.constant 0.000000e+00 : f32
    %212 = vector.broadcast %cst_95 : f32 to vector<1x128xf32>
    %213 = arith.maximumf %211, %212 : vector<1x128xf32>
    %214 = arith.select %18, %213, %211 : vector<1x128xi1>, vector<1x128xf32>
    %c6 = arith.constant 6 : index
    %c0_96 = arith.constant 0 : index
    %215 = vector.load %arg13[%c6, %c0_96] : memref<8x128xf32, #tpu.memory_space<vmem>>, vector<1x128xf32>
    tpu.vector_store %arg13[%c6, %c0_96], %214 {strides = array<i32>} : memref<8x128xf32, #tpu.memory_space<vmem>>, vector<1x128xf32>,
    %216 = vector.extract_strided_slice %32 {offsets = [7, 0], sizes = [1, 128], strides = [1, 1]} : vector<8x128xf32> to vector<1x128xf32>
    %217 = arith.truncf %205 : vector<1x128xf32> to vector<1x128xbf16>
    %cst_97 = arith.constant dense<0.000000e+00> : vector<1x128xf32>
    %218 = tpu.matmul %217, %34, %cst_97 {dimension_numbers = #tpu.dot_dimension_numbers<[1], [0], [0], [1], [0, 0, 1, 1], [], []>} : vector<1x128xbf16>, vector<128x128xbf16>, vector<1x128xf32> -> vector<1x128xf32>
    %219 = arith.addf %216, %218 : vector<1x128xf32>
    %220 = math.tanh %219 : vector<1x128xf32>
    %221 = arith.mulf %8, %220 : vector<1x128xf32>
    %222 = arith.addf %221, %11 : vector<1x128xf32>
    %c96_i32_98 = arith.constant 96 : i32
    %223 = tpu.dynamic_rotate %222 by %c96_i32_98 dim 1 : vector<1x128xf32>, i32 -> vector<1x128xf32>
    %c64_i32_99 = arith.constant 64 : i32
    %224 = tpu.dynamic_rotate %222 by %c64_i32_99 dim 1 : vector<1x128xf32>, i32 -> vector<1x128xf32>
    %c32_i32_100 = arith.constant 32 : i32
    %225 = tpu.dynamic_rotate %222 by %c32_i32_100 dim 1 : vector<1x128xf32>, i32 -> vector<1x128xf32>
    %226 = arith.mulf %223, %203 : vector<1x128xf32>
    %227 = arith.mulf %222, %224 : vector<1x128xf32>
    %228 = arith.addf %226, %227 : vector<1x128xf32>
    %229 = math.tanh %228 : vector<1x128xf32>
    %230 = arith.mulf %225, %229 : vector<1x128xf32>
    %cst_101 = arith.constant dense<0.000000e+00> : vector<1x32xf32>
    %231 = tpu.matmul %230, %35, %cst_101 {dimension_numbers = #tpu.dot_dimension_numbers<[1], [0], [0], [1], [0, 0, 1, 1], [], []>} : vector<1x128xf32>, vector<128x32xf32>, vector<1x32xf32> -> vector<1x32xf32>
    %232 = arith.addf %231, %36 : vector<1x32xf32>
    %cst_102 = arith.constant 0.000000e+00 : f32
    %233 = vector.broadcast %cst_102 : f32 to vector<1x32xf32>
    %234 = arith.maximumf %232, %233 : vector<1x32xf32>
    %cst_103 = arith.constant dense<0.000000e+00> : vector<1x128xf32>
    %235 = tpu.matmul %234, %37, %cst_103 {dimension_numbers = #tpu.dot_dimension_numbers<[1], [0], [0], [1], [0, 0, 1, 1], [], []>} : vector<1x32xf32>, vector<32x128xf32>, vector<1x128xf32> -> vector<1x128xf32>
    %236 = arith.addf %235, %38 : vector<1x128xf32>
    %cst_104 = arith.constant 0.000000e+00 : f32
    %237 = vector.broadcast %cst_104 : f32 to vector<1x128xf32>
    %238 = arith.maximumf %236, %237 : vector<1x128xf32>
    %239 = arith.select %18, %238, %236 : vector<1x128xi1>, vector<1x128xf32>
    %c7 = arith.constant 7 : index
    %c0_105 = arith.constant 0 : index
    %240 = vector.load %arg13[%c7, %c0_105] : memref<8x128xf32, #tpu.memory_space<vmem>>, vector<1x128xf32>
    tpu.vector_store %arg13[%c7, %c0_105], %239 {strides = array<i32>} : memref<8x128xf32, #tpu.memory_space<vmem>>, vector<1x128xf32>,
    %241 = arith.mulf %230, %15 : vector<1x128xf32>
    %c0_106 = arith.constant 0 : index
    %c0_107 = arith.constant 0 : index
    %242 = vector.load %arg14[%c0_106, %c0_107] : memref<2x128xf32, #tpu.memory_space<vmem>>, vector<1x128xf32>
    tpu.vector_store %arg14[%c0_106, %c0_107], %241 {strides = array<i32>} : memref<2x128xf32, #tpu.memory_space<vmem>>, vector<1x128xf32>,
    %243 = arith.mulf %228, %15 : vector<1x128xf32>
    %c1_108 = arith.constant 1 : index
    %c0_109 = arith.constant 0 : index
    %244 = vector.load %arg14[%c1_108, %c0_109] : memref<2x128xf32, #tpu.memory_space<vmem>>, vector<1x128xf32>
    tpu.vector_store %arg14[%c1_108, %c0_109], %243 {strides = array<i32>} : memref<2x128xf32, #tpu.memory_space<vmem>>, vector<1x128xf32>,
    return
  }
}

</mosaic_0001>

<llo_original>
// kernel: tpu_custom_call.1
$region0: #{tpu_custom_call.1}
  #allocation0 [shape = 'u32[]', space=smem, size = 0x4, offset = 0x4, fixed_abs, tag = 'smem constant byte address 0x4 - core index']
  #allocation1 [shape = 'u32[144,128]{1,0:T(1,128)}', space=vmem, size = 0x12000, scoped, tag = 'internal scratch']
  %s0 = inlined_call_operand.vmem [shape: f32[8,16], index: 0, kind: input, shape index: {}]
  %s1 = inlined_call_operand.vmem [shape: f32[8,16], index: 1, kind: input, shape index: {}]
  %s2 = inlined_call_operand.vmem [shape: f32[8,4], index: 2, kind: input, shape index: {}]
  %s3 = inlined_call_operand.vmem [shape: f32[16,128], index: 3, kind: input, shape index: {}]
  %s4 = inlined_call_operand.hbm [shape: f32[16,128], index: 4, kind: input, shape index: {}]
  %s5 = inlined_call_operand.hbm [shape: f32[4,128], index: 5, kind: input, shape index: {}]
  %s6 = inlined_call_operand.vmem [shape: f32[1,128], index: 6, kind: input, shape index: {}]
  %s7 = inlined_call_operand.vmem [shape: f32[128,128], index: 7, kind: input, shape index: {}]
  %s8 = inlined_call_operand.vmem [shape: f32[128,32], index: 8, kind: input, shape index: {}]
  %s9 = inlined_call_operand.hbm [shape: f32[1,32], index: 9, kind: input, shape index: {}]
  %s10 = inlined_call_operand.vmem [shape: f32[32,128], index: 10, kind: input, shape index: {}]
  %s11 = inlined_call_operand.hbm [shape: f32[1,128], index: 11, kind: input, shape index: {}]
  %s12 = inlined_call_operand.hbm [shape: f32[2,128], index: 12, kind: input, shape index: {}, may-alias: {12,14}]
  %s13 = inlined_call_operand.hbm [shape: f32[8,128], index: 13, kind: output, shape index: {0}]
  %s14 = inlined_call_operand.hbm [shape: f32[2,128], index: 14, kind: output, shape index: {1}, may-alias: {12,14}]
  %15 = xla_tuple %s13, %s14
  %s16 = sld [smem:[#allocation0]]
  $region90: #{tpu_custom_call.1} parent=0
    _
  %s18 = ssub.s32 1, %s16
  %s19 = scalar_select 0, %s18, %s16
  $region1: #{tpu_custom_call.1} parent=0
    #allocation2 [shape = 'u8[8192]{0}', space=vmem, size = 0x2000, scoped, tag = 'input window, operand 4, single buffered']
    #allocation3 [shape = 's32[1]{0}', space=sflag, size = 0x4, scoped, tag = 'scoped memory for tpu_custom_call.1']
    #allocation4 [shape = 's32[1]{0}', space=sflag, size = 0x4, scoped, tag = 'scoped memory for tpu_custom_call.1']
    #allocation5 [shape = 'u8[2048]{0}', space=vmem, size = 0x800, scoped, tag = 'input window, operand 5, single buffered']
    #allocation6 [shape = 's32[1]{0}', space=sflag, size = 0x4, scoped, tag = 'scoped memory for tpu_custom_call.1']
    #allocation7 [shape = 'u8[512]{0}', space=vmem, size = 0x400, scoped, tag = 'input window, operand 9, single buffered']
    #allocation8 [shape = 'u8[512]{0}', space=vmem, size = 0x400, scoped, tag = 'input window, operand 11, single buffered']
    #allocation9 [shape = 's32[1]{0}', space=sflag, size = 0x4, scoped, tag = 'scoped memory for tpu_custom_call.1']
    #allocation10 [shape = 'u8[1024]{0}', space=vmem, size = 0x400, scoped, tag = 'input window, operand 12, single buffered']
    #allocation11 [shape = 'u8[4096]{0}', space=vmem, size = 0x1000, scoped, tag = 'output window, operand 0, single buffered']
    #allocation12 [shape = 'u8[1024]{0}', space=vmem, size = 0x400, scoped, tag = 'output window, operand 1, single buffered']
    #allocation13 [shape = 's32[1]{0}', space=sflag, size = 0x4, scoped, tag = 'scoped memory for tpu_custom_call.1']
    %20 = vsyncpa [#allocation3], 0
    %21 = vsyncpa [#allocation6], 0
    %22 = vsyncpa [#allocation9], 0
    %23 = vsyncpa [#allocation4], 0
    %24 = vsyncpa [#allocation13], 0
    // Predicated region
    $region2: #{tpu_custom_call.1} parent=1 // pred_check
      _
    $region3: #{tpu_custom_call.1} parent=1 // pred_check_branch
      %26 = sbr.rel (0) target = $region5
    $region4: #{tpu_custom_call.1} parent=1 // pred_region
      _
    $region5: #{tpu_custom_call.1} parent=1 // pred_fallthru
      _
    // Predicated region
    $region6: #{tpu_custom_call.1} parent=1 // pred_check
      _
    $region7: #{tpu_custom_call.1} parent=1 // pred_check_branch
      %28 = sbr.rel (0) target = $region9
    $region8: #{tpu_custom_call.1} parent=1 // pred_region
      _
    $region9: #{tpu_custom_call.1} parent=1 // pred_fallthru
      _
    // Predicated region
    $region10: #{tpu_custom_call.1} parent=1 // pred_check
      _
    $region11: #{tpu_custom_call.1} parent=1 // pred_check_branch
      %30 = sbr.rel (0) target = $region13
    $region12: #{tpu_custom_call.1} parent=1 // pred_region
      _
    $region13: #{tpu_custom_call.1} parent=1 // pred_fallthru
      _
    // Predicated region
    $region14: #{tpu_custom_call.1} parent=1 // pred_check
      _
    $region15: #{tpu_custom_call.1} parent=1 // pred_check_branch
      %32 = sbr.rel (0) target = $region17
    $region16: #{tpu_custom_call.1} parent=1 // pred_region
      _
    $region17: #{tpu_custom_call.1} parent=1 // pred_fallthru
      _
    // Predicated region
    $region18: #{tpu_custom_call.1} parent=1 // pred_check
      _
    $region19: #{tpu_custom_call.1} parent=1 // pred_check_branch
      %34 = sbr.rel (0) target = $region21
    $region20: #{tpu_custom_call.1} parent=1 // pred_region
      %s36 = ssub.s32 256, 256
      %37 = vsyncadd [#allocation3], %s36
      %s38 = sshll.u32 [#allocation2], 4
      %s39 = int_to_ptr.vmem [resolvable:$true] %s38
      %44 = dma.hbm_to_vmem [thread:$0]  %s4, 256, %s39, [#allocation3], 128, 128, 8
    $region21: #{tpu_custom_call.1} parent=1 // pred_fallthru
      _
    // Predicated region
    $region22: #{tpu_custom_call.1} parent=1 // pred_check
      _
    $region23: #{tpu_custom_call.1} parent=1 // pred_check_branch
      %46 = sbr.rel (0) target = $region25
    $region24: #{tpu_custom_call.1} parent=1 // pred_region
      %s48 = ssub.s32 64, 64
      %49 = vsyncadd [#allocation6], %s48
      %s51 = sshll.u32 [#allocation5], 4
      %s52 = int_to_ptr.vmem [resolvable:$true] %s51
      %54 = dma.hbm_to_vmem [thread:$0]  %s5, 64, %s52, [#allocation6]
    $region25: #{tpu_custom_call.1} parent=1 // pred_fallthru
      _
    // Predicated region
    $region26: #{tpu_custom_call.1} parent=1 // pred_check
      _
    $region27: #{tpu_custom_call.1} parent=1 // pred_check_branch
      %56 = sbr.rel (0) target = $region29
    $region28: #{tpu_custom_call.1} parent=1 // pred_region
      _
    $region29: #{tpu_custom_call.1} parent=1 // pred_fallthru
      _
    // Predicated region
    $region30: #{tpu_custom_call.1} parent=1 // pred_check
      _
    $region31: #{tpu_custom_call.1} parent=1 // pred_check_branch
      %58 = sbr.rel (0) target = $region33
    $region32: #{tpu_custom_call.1} parent=1 // pred_region
      _
    $region33: #{tpu_custom_call.1} parent=1 // pred_fallthru
      _
    // Predicated region
    $region34: #{tpu_custom_call.1} parent=1 // pred_check
      _
    $region35: #{tpu_custom_call.1} parent=1 // pred_check_branch
      %60 = sbr.rel (0) target = $region37
    $region36: #{tpu_custom_call.1} parent=1 // pred_region
      _
    $region37: #{tpu_custom_call.1} parent=1 // pred_fallthru
      _
    // Predicated region
    $region38: #{tpu_custom_call.1} parent=1 // pred_check
      _
    $region39: #{tpu_custom_call.1} parent=1 // pred_check_branch
      %62 = sbr.rel (0) target = $region41
    $region40: #{tpu_custom_call.1} parent=1 // pred_region
      %s64 = ssub.s32 16, 16
      %65 = vsyncadd [#allocation6], %s64
      %s67 = sshll.u32 [#allocation7], 4
      %s68 = int_to_ptr.vmem [resolvable:$true] %s67
      %70 = dma.hbm_to_vmem [thread:$0]  %s9, 16, %s68, [#allocation6]
    $region41: #{tpu_custom_call.1} parent=1 // pred_fallthru
      _
    // Predicated region
    $region42: #{tpu_custom_call.1} parent=1 // pred_check
      _
    $region43: #{tpu_custom_call.1} parent=1 // pred_check_branch
      %72 = sbr.rel (0) target = $region45
    $region44: #{tpu_custom_call.1} parent=1 // pred_region
      _
    $region45: #{tpu_custom_call.1} parent=1 // pred_fallthru
      _
    // Predicated region
    $region46: #{tpu_custom_call.1} parent=1 // pred_check
      _
    $region47: #{tpu_custom_call.1} parent=1 // pred_check_branch
      %74 = sbr.rel (0) target = $region49
    $region48: #{tpu_custom_call.1} parent=1 // pred_region
      %s76 = ssub.s32 16, 16
      %77 = vsyncadd [#allocation9], %s76
      %s79 = sshll.u32 [#allocation8], 4
      %s80 = int_to_ptr.vmem [resolvable:$true] %s79
      %82 = dma.hbm_to_vmem [thread:$0]  %s11, 16, %s80, [#allocation9]
    $region49: #{tpu_custom_call.1} parent=1 // pred_fallthru
      _
    // Predicated region
    $region50: #{tpu_custom_call.1} parent=1 // pred_check
      _
    $region51: #{tpu_custom_call.1} parent=1 // pred_check_branch
      %84 = sbr.rel (0) target = $region53
    $region52: #{tpu_custom_call.1} parent=1 // pred_region
      %s86 = ssub.s32 32, 32
      %87 = vsyncadd [#allocation9], %s86
      %s89 = sshll.u32 [#allocation10], 4
      %s90 = int_to_ptr.vmem [resolvable:$true] %s89
      %92 = dma.hbm_to_vmem [thread:$0]  %s12, 32, %s90, [#allocation9]
    $region53: #{tpu_custom_call.1} parent=1 // pred_fallthru
      _
    // Predicated region
    $region54: #{tpu_custom_call.1} parent=1 // pred_check
      _
    $region55: #{tpu_custom_call.1} parent=1 // pred_check_branch
      %94 = sbr.rel (0) target = $region57
    $region56: #{tpu_custom_call.1} parent=1 // pred_region
      %95 = dma.done [#allocation3], 256
    $region57: #{tpu_custom_call.1} parent=1 // pred_fallthru
      _
    // Predicated region
    $region58: #{tpu_custom_call.1} parent=1 // pred_check
      _
    $region59: #{tpu_custom_call.1} parent=1 // pred_check_branch
      %97 = sbr.rel (0) target = $region61
    $region60: #{tpu_custom_call.1} parent=1 // pred_region
      %98 = dma.done [#allocation6], 64
    $region61: #{tpu_custom_call.1} parent=1 // pred_fallthru
      _
    // Predicated region
    $region62: #{tpu_custom_call.1} parent=1 // pred_check
      _
    $region63: #{tpu_custom_call.1} parent=1 // pred_check_branch
      %100 = sbr.rel (0) target = $region65
    $region64: #{tpu_custom_call.1} parent=1 // pred_region
      %101 = dma.done [#allocation6], 16
    $region65: #{tpu_custom_call.1} parent=1 // pred_fallthru
      _
    // Predicated region
    $region66: #{tpu_custom_call.1} parent=1 // pred_check
      _
    $region67: #{tpu_custom_call.1} parent=1 // pred_check_branch
      %103 = sbr.rel (0) target = $region69
    $region68: #{tpu_custom_call.1} parent=1 // pred_region
      %104 = dma.done [#allocation9], 16
    $region69: #{tpu_custom_call.1} parent=1 // pred_fallthru
      _
    // Predicated region
    $region70: #{tpu_custom_call.1} parent=1 // pred_check
      _
    $region71: #{tpu_custom_call.1} parent=1 // pred_check_branch
      %106 = sbr.rel (0) target = $region73
    $region72: #{tpu_custom_call.1} parent=1 // pred_region
      %107 = dma.done [#allocation9], 32
    $region73: #{tpu_custom_call.1} parent=1 // pred_fallthru
      _
    %v109 = vlaneseq
    %v110 = vand.u32 %v109, 127
    %vm111 = vcmp.ge.s32.totalorder %v110, 64
    %vm112 = vcmp.lt.s32.totalorder %v110, 96
    %vm113 = vmand %vm111, %vm112
    %v114 = vsel %vm113, 1.0, 0.5
    %v115 = vsel %vm113, 0.0, 0.5
    %vm116 = vcmp.lt.s32.totalorder %v110, 32
    %v117 = vsel %vm116, 1, 0
    %v118 = vcvt.s32.f32 %v117
    %vm119 = vcmp.ge.s32.totalorder %v110, 16
    %v120 = vld [vmem:[%s0] sm:$0xff]
    %v121 = vld [vmem:[%s3] sm:$0xff]
    %v122 = vld [vmem:[%s3 + $0x8] sm:$0xff]
    %v123 = vld [vmem:[%s1] sm:$0xff]
    %v124 = vld [vmem:[#allocation2] sm:$0xff]
    %v125 = vld [vmem:[#allocation2 + $0x8] sm:$0xff]
    %vm126 = vcmask 130048
    %v128 = vsel %vm126, %v123, 0
    %130 = vmatprep.subr.mxu0 0.0
    %131 = vmatpush1.msra.mxu0 0.0
    %132 = vmatprep.subr.mxu0 0.0
    %133 = vmatpush1.msra.mxu0 0.0
    %134 = vmatprep.subr.mxu0 0.0
    %135 = vmatpush1.msra.mxu0 0.0
    %136 = vmatprep.subr.mxu0 0.0
    %137 = vmatpush1.msra.mxu0 0.0
    %138 = vmatprep.subr.mxu0 0.0
    %139 = vmatpush1.msra.mxu0 0.0
    %140 = vmatprep.subr.mxu0 0.0
    %141 = vmatpush1.msra.mxu0 0.0
    %142 = vmatprep.subr.mxu0 0.0
    %143 = vmatpush1.msra.mxu0 0.0
    %144 = vmatprep.subr.mxu0 0.0
    %145 = vmatpush1.msra.mxu0 0.0
    %146 = vmatprep.subr.mxu0 0.0
    %147 = vmatpush1.msra.mxu0 0.0
    %148 = vmatprep.subr.mxu0 0.0
    %149 = vmatpush1.msra.mxu0 0.0
    %150 = vmatprep.subr.mxu0 0.0
    %151 = vmatpush1.msra.mxu0 0.0
    %152 = vmatprep.subr.mxu0 0.0
    %153 = vmatpush1.msra.mxu0 0.0
    %154 = vmatprep.subr.mxu0 0.0
    %155 = vmatpush1.msra.mxu0 0.0
    %156 = vmatprep.subr.mxu0 0.0
    %157 = vmatpush1.msra.mxu0 0.0
    %158 = vmatprep.subr.mxu0 0.0
    %159 = vmatpush1.msra.mxu0 %v125
    %160 = vmatprep.subr.mxu0 0.0
    %161 = vmatpush1.msra.mxu0 %v124
    %162 = vmatprep.subr.mxu0 0.0
    %163 = vmatpush2.msra.mxu0 0.0
    %164 = vmatprep.subr.mxu0 0.0
    %165 = vmatpush2.msra.mxu0 0.0
    %166 = vmatprep.subr.mxu0 0.0
    %167 = vmatpush2.msra.mxu0 0.0
    %168 = vmatprep.subr.mxu0 0.0
    %169 = vmatpush2.msra.mxu0 0.0
    %170 = vmatprep.subr.mxu0 0.0
    %171 = vmatpush2.msra.mxu0 0.0
    %172 = vmatprep.subr.mxu0 0.0
    %173 = vmatpush2.msra.mxu0 0.0
    %174 = vmatprep.subr.mxu0 0.0
    %175 = vmatpush2.msra.mxu0 0.0
    %176 = vmatprep.subr.mxu0 0.0
    %177 = vmatpush2.msra.mxu0 0.0
    %178 = vmatprep.subr.mxu0 0.0
    %179 = vmatpush2.msra.mxu0 0.0
    %180 = vmatprep.subr.mxu0 0.0
    %181 = vmatpush2.msra.mxu0 0.0
    %182 = vmatprep.subr.mxu0 0.0
    %183 = vmatpush2.msra.mxu0 0.0
    %184 = vmatprep.subr.mxu0 0.0
    %185 = vmatpush2.msra.mxu0 0.0
    %186 = vmatprep.subr.mxu0 0.0
    %187 = vmatpush2.msra.mxu0 0.0
    %188 = vmatprep.subr.mxu0 0.0
    %189 = vmatpush2.msra.mxu0 0.0
    %190 = vmatprep.subr.mxu0 0.0
    %191 = vmatpush2.msra.mxu0 0.0
    %192 = vmatprep.subr.mxu0 0.0
    %193 = vmatpush2.msra.mxu0 0.0
    %194 = vmatprep.mubr.f32.mxu0 0.0
    %195 = vmatmul.mubr.f32.gmra.mxu0 %v128
    %v196 = vpop.f32.mrf.mxu0
    %v197 = vadd.f32 0.0, %v196
    %v198 = vpop.f32.mrf.mxu0
    %199 = vdwg.mxu0
    %v201 = vsel %vm126, %v120, 0
    %203 = vmatprep.subr.mxu0 0.0
    %204 = vmatpush1.msra.mxu0 0.0
    %205 = vmatprep.subr.mxu0 0.0
    %206 = vmatpush1.msra.mxu0 0.0
    %207 = vmatprep.subr.mxu0 0.0
    %208 = vmatpush1.msra.mxu0 0.0
    %209 = vmatprep.subr.mxu0 0.0
    %210 = vmatpush1.msra.mxu0 0.0
    %211 = vmatprep.subr.mxu0 0.0
    %212 = vmatpush1.msra.mxu0 0.0
    %213 = vmatprep.subr.mxu0 0.0
    %214 = vmatpush1.msra.mxu0 0.0
    %215 = vmatprep.subr.mxu0 0.0
    %216 = vmatpush1.msra.mxu0 0.0
    %217 = vmatprep.subr.mxu0 0.0
    %218 = vmatpush1.msra.mxu0 0.0
    %219 = vmatprep.subr.mxu0 0.0
    %220 = vmatpush1.msra.mxu0 0.0
    %221 = vmatprep.subr.mxu0 0.0
    %222 = vmatpush1.msra.mxu0 0.0
    %223 = vmatprep.subr.mxu0 0.0
    %224 = vmatpush1.msra.mxu0 0.0
    %225 = vmatprep.subr.mxu0 0.0
    %226 = vmatpush1.msra.mxu0 0.0
    %227 = vmatprep.subr.mxu0 0.0
    %228 = vmatpush1.msra.mxu0 0.0
    %229 = vmatprep.subr.mxu0 0.0
    %230 = vmatpush1.msra.mxu0 0.0
    %231 = vmatprep.subr.mxu0 0.0
    %232 = vmatpush1.msra.mxu0 %v122
    %233 = vmatprep.subr.mxu0 0.0
    %234 = vmatpush1.msra.mxu0 %v121
    %235 = vmatprep.subr.mxu0 0.0
    %236 = vmatpush2.msra.mxu0 0.0
    %237 = vmatprep.subr.mxu0 0.0
    %238 = vmatpush2.msra.mxu0 0.0
    %239 = vmatprep.subr.mxu0 0.0
    %240 = vmatpush2.msra.mxu0 0.0
    %241 = vmatprep.subr.mxu0 0.0
    %242 = vmatpush2.msra.mxu0 0.0
    %243 = vmatprep.subr.mxu0 0.0
    %244 = vmatpush2.msra.mxu0 0.0
    %245 = vmatprep.subr.mxu0 0.0
    %246 = vmatpush2.msra.mxu0 0.0
    %247 = vmatprep.subr.mxu0 0.0
    %248 = vmatpush2.msra.mxu0 0.0
    %249 = vmatprep.subr.mxu0 0.0
    %250 = vmatpush2.msra.mxu0 0.0
    %251 = vmatprep.subr.mxu0 0.0
    %252 = vmatpush2.msra.mxu0 0.0
    %253 = vmatprep.subr.mxu0 0.0
    %254 = vmatpush2.msra.mxu0 0.0
    %255 = vmatprep.subr.mxu0 0.0
    %256 = vmatpush2.msra.mxu0 0.0
    %257 = vmatprep.subr.mxu0 0.0
    %258 = vmatpush2.msra.mxu0 0.0
    %259 = vmatprep.subr.mxu0 0.0
    %260 = vmatpush2.msra.mxu0 0.0
    %261 = vmatprep.subr.mxu0 0.0
    %262 = vmatpush2.msra.mxu0 0.0
    %263 = vmatprep.subr.mxu0 0.0
    %264 = vmatpush2.msra.mxu0 0.0
    %265 = vmatprep.subr.mxu0 0.0
    %266 = vmatpush2.msra.mxu0 0.0
    %267 = vmatprep.mubr.f32.mxu0 0.0
    %268 = vmatmul.mubr.f32.gmra.mxu0 %v201
    %v269 = vpop.f32.mrf.mxu0
    %v270 = vadd.f32 %v197, %v269
    %v271 = vpop.f32.mrf.mxu0
    %272 = vdwg.mxu0
    %v273 = vld [vmem:[%s2] sm:$0xff]
    %v274 = vld [vmem:[#allocation5] sm:$0xf]
    %vm275 = vcmask 31744
    %v277 = vsel %vm275, %v273, 0
    %vm279 = vcmask 1043456
    %v281 = vsel %vm279, %v274, 0
    %283 = vmatprep.subr.mxu0 0.0
    %284 = vmatpush1.msra.mxu0 0.0
    %285 = vmatprep.subr.mxu0 0.0
    %286 = vmatpush1.msra.mxu0 0.0
    %287 = vmatprep.subr.mxu0 0.0
    %288 = vmatpush1.msra.mxu0 0.0
    %289 = vmatprep.subr.mxu0 0.0
    %290 = vmatpush1.msra.mxu0 0.0
    %291 = vmatprep.subr.mxu0 0.0
    %292 = vmatpush1.msra.mxu0 0.0
    %293 = vmatprep.subr.mxu0 0.0
    %294 = vmatpush1.msra.mxu0 0.0
    %295 = vmatprep.subr.mxu0 0.0
    %296 = vmatpush1.msra.mxu0 0.0
    %297 = vmatprep.subr.mxu0 0.0
    %298 = vmatpush1.msra.mxu0 0.0
    %299 = vmatprep.subr.mxu0 0.0
    %300 = vmatpush1.msra.mxu0 0.0
    %301 = vmatprep.subr.mxu0 0.0
    %302 = vmatpush1.msra.mxu0 0.0
    %303 = vmatprep.subr.mxu0 0.0
    %304 = vmatpush1.msra.mxu0 0.0
    %305 = vmatprep.subr.mxu0 0.0
    %306 = vmatpush1.msra.mxu0 0.0
    %307 = vmatprep.subr.mxu0 0.0
    %308 = vmatpush1.msra.mxu0 0.0
    %309 = vmatprep.subr.mxu0 0.0
    %310 = vmatpush1.msra.mxu0 0.0
    %311 = vmatprep.subr.mxu0 0.0
    %312 = vmatpush1.msra.mxu0 0.0
    %313 = vmatprep.subr.mxu0 0.0
    %314 = vmatpush1.msra.mxu0 %v281
    %315 = vmatprep.subr.mxu0 0.0
    %316 = vmatpush2.msra.mxu0 0.0
    %317 = vmatprep.subr.mxu0 0.0
    %318 = vmatpush2.msra.mxu0 0.0
    %319 = vmatprep.subr.mxu0 0.0
    %320 = vmatpush2.msra.mxu0 0.0
    %321 = vmatprep.subr.mxu0 0.0
    %322 = vmatpush2.msra.mxu0 0.0
    %323 = vmatprep.subr.mxu0 0.0
    %324 = vmatpush2.msra.mxu0 0.0
    %325 = vmatprep.subr.mxu0 0.0
    %326 = vmatpush2.msra.mxu0 0.0
    %327 = vmatprep.subr.mxu0 0.0
    %328 = vmatpush2.msra.mxu0 0.0
    %329 = vmatprep.subr.mxu0 0.0
    %330 = vmatpush2.msra.mxu0 0.0
    %331 = vmatprep.subr.mxu0 0.0
    %332 = vmatpush2.msra.mxu0 0.0
    %333 = vmatprep.subr.mxu0 0.0
    %334 = vmatpush2.msra.mxu0 0.0
    %335 = vmatprep.subr.mxu0 0.0
    %336 = vmatpush2.msra.mxu0 0.0
    %337 = vmatprep.subr.mxu0 0.0
    %338 = vmatpush2.msra.mxu0 0.0
    %339 = vmatprep.subr.mxu0 0.0
    %340 = vmatpush2.msra.mxu0 0.0
    %341 = vmatprep.subr.mxu0 0.0
    %342 = vmatpush2.msra.mxu0 0.0
    %343 = vmatprep.subr.mxu0 0.0
    %344 = vmatpush2.msra.mxu0 0.0
    %345 = vmatprep.subr.mxu0 0.0
    %346 = vmatpush2.msra.mxu0 0.0
    %347 = vmatprep.mubr.f32.mxu0 0.0
    %348 = vmatmul.mubr.f32.gmra.mxu0 %v277
    %v349 = vpop.f32.mrf.mxu0
    %v350 = vadd.f32 0.0, %v349
    %v351 = vpop.f32.mrf.mxu0
    %352 = vdwg.mxu0
    %v353 = vadd.f32 %v270, %v350
    %v354 = vld [vmem:[%s6] sm:$0x1]
    %v356 = vlaneseq
    %v357 = vshrl.u32 %v356, 7
    %v358 = vsub.s32 0, %v357
    %v359 = vrot.slane %v354, %v358
    %v361 = vadd.f32 %v353, %v359
    %v362 = vld [vmem:[%s7] sm:$0xff]
    %v363 = vld [vmem:[%s7 + $0x8] sm:$0xff]
    %v364 = vld [vmem:[%s7 + $0x10] sm:$0xff]
    %v365 = vld [vmem:[%s7 + $0x18] sm:$0xff]
    %v366 = vld [vmem:[%s7 + $0x20] sm:$0xff]
    %v367 = vld [vmem:[%s7 + $0x28] sm:$0xff]
    %v368 = vld [vmem:[%s7 + $0x30] sm:$0xff]
    %v369 = vld [vmem:[%s7 + $0x38] sm:$0xff]
    %v370 = vld [vmem:[%s7 + $0x40] sm:$0xff]
    %v371 = vld [vmem:[%s7 + $0x48] sm:$0xff]
    %v372 = vld [vmem:[%s7 + $0x50] sm:$0xff]
    %v373 = vld [vmem:[%s7 + $0x58] sm:$0xff]
    %v374 = vld [vmem:[%s7 + $0x60] sm:$0xff]
    %v375 = vld [vmem:[%s7 + $0x68] sm:$0xff]
    %v376 = vld [vmem:[%s7 + $0x70] sm:$0xff]
    %v377 = vld [vmem:[%s7 + $0x78] sm:$0xff]
    %v378 = vpack.c.bf16 %v363, %v362
    %v379 = vpack.c.bf16 %v365, %v364
    %v380 = vpack.c.bf16 %v367, %v366
    %v381 = vpack.c.bf16 %v369, %v368
    %v382 = vpack.c.bf16 %v371, %v370
    %v383 = vpack.c.bf16 %v373, %v372
    %v384 = vpack.c.bf16 %v375, %v374
    %v385 = vpack.c.bf16 %v377, %v376
    %v386 = vld [vmem:[%s8] sm:$0xff]
    %v387 = vld [vmem:[%s8 + $0x8] sm:$0xff]
    %v388 = vld [vmem:[%s8 + $0x10] sm:$0xff]
    %v389 = vld [vmem:[%s8 + $0x18] sm:$0xff]
    %v390 = vld [vmem:[%s8 + $0x20] sm:$0xff]
    %v391 = vld [vmem:[%s8 + $0x28] sm:$0xff]
    %v392 = vld [vmem:[%s8 + $0x30] sm:$0xff]
    %v393 = vld [vmem:[%s8 + $0x38] sm:$0xff]
    %v394 = vld [vmem:[%s8 + $0x40] sm:$0xff]
    %v395 = vld [vmem:[%s8 + $0x48] sm:$0xff]
    %v396 = vld [vmem:[%s8 + $0x50] sm:$0xff]
    %v397 = vld [vmem:[%s8 + $0x58] sm:$0xff]
    %v398 = vld [vmem:[%s8 + $0x60] sm:$0xff]
    %v399 = vld [vmem:[%s8 + $0x68] sm:$0xff]
    %v400 = vld [vmem:[%s8 + $0x70] sm:$0xff]
    %v401 = vld [vmem:[%s8 + $0x78] sm:$0xff]
    %v402 = vld [vmem:[#allocation7] sm:$0x1]
    %v403 = vld [vmem:[%s10] sm:$0xff]
    %v404 = vld [vmem:[%s10 + $0x8] sm:$0xff]
    %v405 = vld [vmem:[%s10 + $0x10] sm:$0xff]
    %v406 = vld [vmem:[%s10 + $0x18] sm:$0xff]
    %v407 = vld [vmem:[#allocation8] sm:$0x1]
    %v408 = vld [vmem:[#allocation10] sm:$0x1]
    %v409 = vld [vmem:[#allocation10 + $0x1] sm:$0x1]
    %v410 = vpack.c.bf16 %v408, %v408
    %411 = vmatprep.subr.bf16.mxu0 0
    %412 = vmatpush1.bf16.msra.mxu0 %v385
    %413 = vmatprep.subr.bf16.mxu0 0
    %414 = vmatpush1.bf16.msra.mxu0 %v384
    %415 = vmatprep.subr.bf16.mxu0 0
    %416 = vmatpush1.bf16.msra.mxu0 %v383
    %417 = vmatprep.subr.bf16.mxu0 0
    %418 = vmatpush1.bf16.msra.mxu0 %v382
    %419 = vmatprep.subr.bf16.mxu0 0
    %420 = vmatpush1.bf16.msra.mxu0 %v381
    %421 = vmatprep.subr.bf16.mxu0 0
    %422 = vmatpush1.bf16.msra.mxu0 %v380
    %423 = vmatprep.subr.bf16.mxu0 0
    %424 = vmatpush1.bf16.msra.mxu0 %v379
    %425 = vmatprep.subr.bf16.mxu0 0
    %426 = vmatpush1.bf16.msra.mxu0 %v378
    %427 = vmatprep.subr.bf16.mxu0 0
    %428 = vmatpush2.bf16.msra.mxu0 0
    %429 = vmatprep.subr.bf16.mxu0 0
    %430 = vmatpush2.bf16.msra.mxu0 0
    %431 = vmatprep.subr.bf16.mxu0 0
    %432 = vmatpush2.bf16.msra.mxu0 0
    %433 = vmatprep.subr.bf16.mxu0 0
    %434 = vmatpush2.bf16.msra.mxu0 0
    %435 = vmatprep.subr.bf16.mxu0 0
    %436 = vmatpush2.bf16.msra.mxu0 0
    %437 = vmatprep.subr.bf16.mxu0 0
    %438 = vmatpush2.bf16.msra.mxu0 0
    %439 = vmatprep.subr.bf16.mxu0 0
    %440 = vmatpush2.bf16.msra.mxu0 0
    %441 = vmatprep.subr.bf16.mxu0 0
    %442 = vmatpush2.bf16.msra.mxu0 0
    %443 = vmatprep.mubr.bf16.mxu0 0
    %444 = vmatmul.mubr.bf16.gmra.mxu0 %v410
    %v445 = vpop.f32.mrf.mxu0
    %v446 = vadd.f32 0.0, %v445
    %v447 = vpop.f32.mrf.mxu0
    %v448 = vpop.f32.mrf.mxu0
    %v449 = vpop.f32.mrf.mxu0
    %450 = vdwg.mxu0
    %v451 = vadd.f32 %v361, %v446
    %v452 = vtanh.pop %v451
    %v453 = vmul.f32 %v114, %v452
    %v454 = vadd.f32 %v453, %v115
    %455 = vrot.lane.b32.xlu0 %v454, 96
    %v456 = vpop.permute.xlu0 %455
    %457 = vrot.lane.b32.xlu0 %v454, 64
    %v458 = vpop.permute.xlu0 %457
    %459 = vrot.lane.b32.xlu0 %v454, 32
    %v460 = vpop.permute.xlu0 %459
    %v461 = vmul.f32 %v456, %v409
    %v462 = vmul.f32 %v454, %v458
    %v463 = vadd.f32 %v461, %v462
    %v464 = vtanh.pop %v463
    %v465 = vmul.f32 %v460, %v464
    %466 = vmatprep.subr.mxu0 0.0
    %467 = vmatpush1.msra.mxu0 %v401
    %468 = vmatprep.subr.mxu0 0.0
    %469 = vmatpush1.msra.mxu0 %v400
    %470 = vmatprep.subr.mxu0 0.0
    %471 = vmatpush1.msra.mxu0 %v399
    %472 = vmatprep.subr.mxu0 0.0
    %473 = vmatpush1.msra.mxu0 %v398
    %474 = vmatprep.subr.mxu0 0.0
    %475 = vmatpush1.msra.mxu0 %v397
    %476 = vmatprep.subr.mxu0 0.0
    %477 = vmatpush1.msra.mxu0 %v396
    %478 = vmatprep.subr.mxu0 0.0
    %479 = vmatpush1.msra.mxu0 %v395
    %480 = vmatprep.subr.mxu0 0.0
    %481 = vmatpush1.msra.mxu0 %v394
    %482 = vmatprep.subr.mxu0 0.0
    %483 = vmatpush1.msra.mxu0 %v393
    %484 = vmatprep.subr.mxu0 0.0
    %485 = vmatpush1.msra.mxu0 %v392
    %486 = vmatprep.subr.mxu0 0.0
    %487 = vmatpush1.msra.mxu0 %v391
    %488 = vmatprep.subr.mxu0 0.0
    %489 = vmatpush1.msra.mxu0 %v390
    %490 = vmatprep.subr.mxu0 0.0
    %491 = vmatpush1.msra.mxu0 %v389
    %492 = vmatprep.subr.mxu0 0.0
    %493 = vmatpush1.msra.mxu0 %v388
    %494 = vmatprep.subr.mxu0 0.0
    %495 = vmatpush1.msra.mxu0 %v387
    %496 = vmatprep.subr.mxu0 0.0
    %497 = vmatpush1.msra.mxu0 %v386
    %498 = vmatprep.subr.mxu0 0.0
    %499 = vmatpush2.msra.mxu0 0.0
    %500 = vmatprep.subr.mxu0 0.0
    %501 = vmatpush2.msra.mxu0 0.0
    %502 = vmatprep.subr.mxu0 0.0
    %503 = vmatpush2.msra.mxu0 0.0
    %504 = vmatprep.subr.mxu0 0.0
    %505 = vmatpush2.msra.mxu0 0.0
    %506 = vmatprep.subr.mxu0 0.0
    %507 = vmatpush2.msra.mxu0 0.0
    %508 = vmatprep.subr.mxu0 0.0
    %509 = vmatpush2.msra.mxu0 0.0
    %510 = vmatprep.subr.mxu0 0.0
    %511 = vmatpush2.msra.mxu0 0.0
    %512 = vmatprep.subr.mxu0 0.0
    %513 = vmatpush2.msra.mxu0 0.0
    %514 = vmatprep.subr.mxu0 0.0
    %515 = vmatpush2.msra.mxu0 0.0
    %516 = vmatprep.subr.mxu0 0.0
    %517 = vmatpush2.msra.mxu0 0.0
    %518 = vmatprep.subr.mxu0 0.0
    %519 = vmatpush2.msra.mxu0 0.0
    %520 = vmatprep.subr.mxu0 0.0
    %521 = vmatpush2.msra.mxu0 0.0
    %522 = vmatprep.subr.mxu0 0.0
    %523 = vmatpush2.msra.mxu0 0.0
    %524 = vmatprep.subr.mxu0 0.0
    %525 = vmatpush2.msra.mxu0 0.0
    %526 = vmatprep.subr.mxu0 0.0
    %527 = vmatpush2.msra.mxu0 0.0
    %528 = vmatprep.subr.mxu0 0.0
    %529 = vmatpush2.msra.mxu0 0.0
    %530 = vmatprep.mubr.f32.mxu0 0.0
    %531 = vmatmul.mubr.f32.gmra.mxu0 %v465
    %v532 = vpop.f32.mrf.mxu0
    %v533 = vadd.f32 %v402, %v532
    %v534 = vpop.f32.mrf.mxu0
    %535 = vdwg.mxu0
    %v536 = vmax.f32 %v533, 0.0
    %vm537 = vcmask 261120
    %v539 = vsel %vm537, %v536, 0
    %541 = vmatprep.subr.mxu0 0.0
    %542 = vmatpush1.msra.mxu0 0.0
    %543 = vmatprep.subr.mxu0 0.0
    %544 = vmatpush1.msra.mxu0 0.0
    %545 = vmatprep.subr.mxu0 0.0
    %546 = vmatpush1.msra.mxu0 0.0
    %547 = vmatprep.subr.mxu0 0.0
    %548 = vmatpush1.msra.mxu0 0.0
    %549 = vmatprep.subr.mxu0 0.0
    %550 = vmatpush1.msra.mxu0 0.0
    %551 = vmatprep.subr.mxu0 0.0
    %552 = vmatpush1.msra.mxu0 0.0
    %553 = vmatprep.subr.mxu0 0.0
    %554 = vmatpush1.msra.mxu0 0.0
    %555 = vmatprep.subr.mxu0 0.0
    %556 = vmatpush1.msra.mxu0 0.0
    %557 = vmatprep.subr.mxu0 0.0
    %558 = vmatpush1.msra.mxu0 0.0
    %559 = vmatprep.subr.mxu0 0.0
    %560 = vmatpush1.msra.mxu0 0.0
    %561 = vmatprep.subr.mxu0 0.0
    %562 = vmatpush1.msra.mxu0 0.0
    %563 = vmatprep.subr.mxu0 0.0
    %564 = vmatpush1.msra.mxu0 0.0
    %565 = vmatprep.subr.mxu0 0.0
    %566 = vmatpush1.msra.mxu0 %v406
    %567 = vmatprep.subr.mxu0 0.0
    %568 = vmatpush1.msra.mxu0 %v405
    %569 = vmatprep.subr.mxu0 0.0
    %570 = vmatpush1.msra.mxu0 %v404
    %571 = vmatprep.subr.mxu0 0.0
    %572 = vmatpush1.msra.mxu0 %v403
    %573 = vmatprep.subr.mxu0 0.0
    %574 = vmatpush2.msra.mxu0 0.0
    %575 = vmatprep.subr.mxu0 0.0
    %576 = vmatpush2.msra.mxu0 0.0
    %577 = vmatprep.subr.mxu0 0.0
    %578 = vmatpush2.msra.mxu0 0.0
    %579 = vmatprep.subr.mxu0 0.0
    %580 = vmatpush2.msra.mxu0 0.0
    %581 = vmatprep.subr.mxu0 0.0
    %582 = vmatpush2.msra.mxu0 0.0
    %583 = vmatprep.subr.mxu0 0.0
    %584 = vmatpush2.msra.mxu0 0.0
    %585 = vmatprep.subr.mxu0 0.0
    %586 = vmatpush2.msra.mxu0 0.0
    %587 = vmatprep.subr.mxu0 0.0
    %588 = vmatpush2.msra.mxu0 0.0
    %589 = vmatprep.subr.mxu0 0.0
    %590 = vmatpush2.msra.mxu0 0.0
    %591 = vmatprep.subr.mxu0 0.0
    %592 = vmatpush2.msra.mxu0 0.0
    %593 = vmatprep.subr.mxu0 0.0
    %594 = vmatpush2.msra.mxu0 0.0
    %595 = vmatprep.subr.mxu0 0.0
    %596 = vmatpush2.msra.mxu0 0.0
    %597 = vmatprep.subr.mxu0 0.0
    %598 = vmatpush2.msra.mxu0 0.0
    %599 = vmatprep.subr.mxu0 0.0
    %600 = vmatpush2.msra.mxu0 0.0
    %601 = vmatprep.subr.mxu0 0.0
    %602 = vmatpush2.msra.mxu0 0.0
    %603 = vmatprep.subr.mxu0 0.0
    %604 = vmatpush2.msra.mxu0 0.0
    %605 = vmatprep.mubr.f32.mxu0 0.0
    %606 = vmatmul.mubr.f32.gmra.mxu0 %v539
    %v607 = vpop.f32.mrf.mxu0
    %v608 = vadd.f32 %v407, %v607
    %v609 = vpop.f32.mrf.mxu0
    %610 = vdwg.mxu0
    %v611 = vmax.f32 %v608, 0.0
    %v612 = vsel %vm119, %v611, %v608
    %613 = vst [vmem:[#allocation11] sm:$0x1] %v612
    %v614 = vpack.c.bf16 %v465, %v465
    %615 = vmatprep.subr.bf16.mxu0 0
    %616 = vmatpush1.bf16.msra.mxu0 %v385
    %617 = vmatprep.subr.bf16.mxu0 0
    %618 = vmatpush1.bf16.msra.mxu0 %v384
    %619 = vmatprep.subr.bf16.mxu0 0
    %620 = vmatpush1.bf16.msra.mxu0 %v383
    %621 = vmatprep.subr.bf16.mxu0 0
    %622 = vmatpush1.bf16.msra.mxu0 %v382
    %623 = vmatprep.subr.bf16.mxu0 0
    %624 = vmatpush1.bf16.msra.mxu0 %v381
    %625 = vmatprep.subr.bf16.mxu0 0
    %626 = vmatpush1.bf16.msra.mxu0 %v380
    %627 = vmatprep.subr.bf16.mxu0 0
    %628 = vmatpush1.bf16.msra.mxu0 %v379
    %629 = vmatprep.subr.bf16.mxu0 0
    %630 = vmatpush1.bf16.msra.mxu0 %v378
    %631 = vmatprep.subr.bf16.mxu0 0
    %632 = vmatpush2.bf16.msra.mxu0 0
    %633 = vmatprep.subr.bf16.mxu0 0
    %634 = vmatpush2.bf16.msra.mxu0 0
    %635 = vmatprep.subr.bf16.mxu0 0
    %636 = vmatpush2.bf16.msra.mxu0 0
    %637 = vmatprep.subr.bf16.mxu0 0
    %638 = vmatpush2.bf16.msra.mxu0 0
    %639 = vmatprep.subr.bf16.mxu0 0
    %640 = vmatpush2.bf16.msra.mxu0 0
    %641 = vmatprep.subr.bf16.mxu0 0
    %642 = vmatpush2.bf16.msra.mxu0 0
    %643 = vmatprep.subr.bf16.mxu0 0
    %644 = vmatpush2.bf16.msra.mxu0 0
    %645 = vmatprep.subr.bf16.mxu0 0
    %646 = vmatpush2.bf16.msra.mxu0 0
    %647 = vmatprep.mubr.bf16.mxu0 0
    %648 = vmatmul.mubr.bf16.gmra.mxu0 %v614
    %v649 = vpop.f32.mrf.mxu0
    %v650 = vadd.f32 0.0, %v649
    %v651 = vpop.f32.mrf.mxu0
    %v652 = vpop.f32.mrf.mxu0
    %v653 = vpop.f32.mrf.mxu0
    %654 = vdwg.mxu0
    %v656 = vrot.slane %v650, 7
    %v658 = vadd.f32 %v361, %v656
    %v659 = vtanh.pop %v658
    %v660 = vmul.f32 %v114, %v659
    %v661 = vadd.f32 %v660, %v115
    %v663 = vrot.slane %v661, 1
    %665 = vrot.lane.b32.xlu0 %v663, 96
    %v666 = vpop.permute.xlu0 %665
    %667 = vrot.lane.b32.xlu0 %v663, 64
    %v668 = vpop.permute.xlu0 %667
    %669 = vrot.lane.b32.xlu0 %v663, 32
    %v670 = vpop.permute.xlu0 %669
    %v671 = vmul.f32 %v666, %v463
    %v673 = vrot.slane %v668, 7
    %v675 = vmul.f32 %v661, %v673
    %v677 = vrot.slane %v675, 1
    %v679 = vadd.f32 %v671, %v677
    %v680 = vtanh.pop %v679
    %v681 = vmul.f32 %v670, %v680
    %682 = vmatprep.subr.mxu0 0.0
    %683 = vmatpush1.msra.mxu0 %v401
    %684 = vmatprep.subr.mxu0 0.0
    %685 = vmatpush1.msra.mxu0 %v400
    %686 = vmatprep.subr.mxu0 0.0
    %687 = vmatpush1.msra.mxu0 %v399
    %688 = vmatprep.subr.mxu0 0.0
    %689 = vmatpush1.msra.mxu0 %v398
    %690 = vmatprep.subr.mxu0 0.0
    %691 = vmatpush1.msra.mxu0 %v397
    %692 = vmatprep.subr.mxu0 0.0
    %693 = vmatpush1.msra.mxu0 %v396
    %694 = vmatprep.subr.mxu0 0.0
    %695 = vmatpush1.msra.mxu0 %v395
    %696 = vmatprep.subr.mxu0 0.0
    %697 = vmatpush1.msra.mxu0 %v394
    %698 = vmatprep.subr.mxu0 0.0
    %699 = vmatpush1.msra.mxu0 %v393
    %700 = vmatprep.subr.mxu0 0.0
    %701 = vmatpush1.msra.mxu0 %v392
    %702 = vmatprep.subr.mxu0 0.0
    %703 = vmatpush1.msra.mxu0 %v391
    %704 = vmatprep.subr.mxu0 0.0
    %705 = vmatpush1.msra.mxu0 %v390
    %706 = vmatprep.subr.mxu0 0.0
    %707 = vmatpush1.msra.mxu0 %v389
    %708 = vmatprep.subr.mxu0 0.0
    %709 = vmatpush1.msra.mxu0 %v388
    %710 = vmatprep.subr.mxu0 0.0
    %711 = vmatpush1.msra.mxu0 %v387
    %712 = vmatprep.subr.mxu0 0.0
    %713 = vmatpush1.msra.mxu0 %v386
    %714 = vmatprep.subr.mxu0 0.0
    %715 = vmatpush2.msra.mxu0 0.0
    %716 = vmatprep.subr.mxu0 0.0
    %717 = vmatpush2.msra.mxu0 0.0
    %718 = vmatprep.subr.mxu0 0.0
    %719 = vmatpush2.msra.mxu0 0.0
    %720 = vmatprep.subr.mxu0 0.0
    %721 = vmatpush2.msra.mxu0 0.0
    %722 = vmatprep.subr.mxu0 0.0
    %723 = vmatpush2.msra.mxu0 0.0
    %724 = vmatprep.subr.mxu0 0.0
    %725 = vmatpush2.msra.mxu0 0.0
    %726 = vmatprep.subr.mxu0 0.0
    %727 = vmatpush2.msra.mxu0 0.0
    %728 = vmatprep.subr.mxu0 0.0
    %729 = vmatpush2.msra.mxu0 0.0
    %730 = vmatprep.subr.mxu0 0.0
    %731 = vmatpush2.msra.mxu0 0.0
    %732 = vmatprep.subr.mxu0 0.0
    %733 = vmatpush2.msra.mxu0 0.0
    %734 = vmatprep.subr.mxu0 0.0
    %735 = vmatpush2.msra.mxu0 0.0
    %736 = vmatprep.subr.mxu0 0.0
    %737 = vmatpush2.msra.mxu0 0.0
    %738 = vmatprep.subr.mxu0 0.0
    %739 = vmatpush2.msra.mxu0 0.0
    %740 = vmatprep.subr.mxu0 0.0
    %741 = vmatpush2.msra.mxu0 0.0
    %742 = vmatprep.subr.mxu0 0.0
    %743 = vmatpush2.msra.mxu0 0.0
    %744 = vmatprep.subr.mxu0 0.0
    %745 = vmatpush2.msra.mxu0 0.0
    %746 = vmatprep.mubr.f32.mxu0 0.0
    %747 = vmatmul.mubr.f32.gmra.mxu0 %v681
    %v748 = vpop.f32.mrf.mxu0
    %v749 = vadd.f32 %v402, %v748
    %v750 = vpop.f32.mrf.mxu0
    %751 = vdwg.mxu0
    %v752 = vmax.f32 %v749, 0.0
    %v754 = vsel %vm537, %v752, 0
    %756 = vmatprep.subr.mxu0 0.0
    %757 = vmatpush1.msra.mxu0 0.0
    %758 = vmatprep.subr.mxu0 0.0
    %759 = vmatpush1.msra.mxu0 0.0
    %760 = vmatprep.subr.mxu0 0.0
    %761 = vmatpush1.msra.mxu0 0.0
    %762 = vmatprep.subr.mxu0 0.0
    %763 = vmatpush1.msra.mxu0 0.0
    %764 = vmatprep.subr.mxu0 0.0
    %765 = vmatpush1.msra.mxu0 0.0
    %766 = vmatprep.subr.mxu0 0.0
    %767 = vmatpush1.msra.mxu0 0.0
    %768 = vmatprep.subr.mxu0 0.0
    %769 = vmatpush1.msra.mxu0 0.0
    %770 = vmatprep.subr.mxu0 0.0
    %771 = vmatpush1.msra.mxu0 0.0
    %772 = vmatprep.subr.mxu0 0.0
    %773 = vmatpush1.msra.mxu0 0.0
    %774 = vmatprep.subr.mxu0 0.0
    %775 = vmatpush1.msra.mxu0 0.0
    %776 = vmatprep.subr.mxu0 0.0
    %777 = vmatpush1.msra.mxu0 0.0
    %778 = vmatprep.subr.mxu0 0.0
    %779 = vmatpush1.msra.mxu0 0.0
    %780 = vmatprep.subr.mxu0 0.0
    %781 = vmatpush1.msra.mxu0 %v406
    %782 = vmatprep.subr.mxu0 0.0
    %783 = vmatpush1.msra.mxu0 %v405
    %784 = vmatprep.subr.mxu0 0.0
    %785 = vmatpush1.msra.mxu0 %v404
    %786 = vmatprep.subr.mxu0 0.0
    %787 = vmatpush1.msra.mxu0 %v403
    %788 = vmatprep.subr.mxu0 0.0
    %789 = vmatpush2.msra.mxu0 0.0
    %790 = vmatprep.subr.mxu0 0.0
    %791 = vmatpush2.msra.mxu0 0.0
    %792 = vmatprep.subr.mxu0 0.0
    %793 = vmatpush2.msra.mxu0 0.0
    %794 = vmatprep.subr.mxu0 0.0
    %795 = vmatpush2.msra.mxu0 0.0
    %796 = vmatprep.subr.mxu0 0.0
    %797 = vmatpush2.msra.mxu0 0.0
    %798 = vmatprep.subr.mxu0 0.0
    %799 = vmatpush2.msra.mxu0 0.0
    %800 = vmatprep.subr.mxu0 0.0
    %801 = vmatpush2.msra.mxu0 0.0
    %802 = vmatprep.subr.mxu0 0.0
    %803 = vmatpush2.msra.mxu0 0.0
    %804 = vmatprep.subr.mxu0 0.0
    %805 = vmatpush2.msra.mxu0 0.0
    %806 = vmatprep.subr.mxu0 0.0
    %807 = vmatpush2.msra.mxu0 0.0
    %808 = vmatprep.subr.mxu0 0.0
    %809 = vmatpush2.msra.mxu0 0.0
    %810 = vmatprep.subr.mxu0 0.0
    %811 = vmatpush2.msra.mxu0 0.0
    %812 = vmatprep.subr.mxu0 0.0
    %813 = vmatpush2.msra.mxu0 0.0
    %814 = vmatprep.subr.mxu0 0.0
    %815 = vmatpush2.msra.mxu0 0.0
    %816 = vmatprep.subr.mxu0 0.0
    %817 = vmatpush2.msra.mxu0 0.0
    %818 = vmatprep.subr.mxu0 0.0
    %819 = vmatpush2.msra.mxu0 0.0
    %820 = vmatprep.mubr.f32.mxu0 0.0
    %821 = vmatmul.mubr.f32.gmra.mxu0 %v754
    %v822 = vpop.f32.mrf.mxu0
    %v823 = vadd.f32 %v407, %v822
    %v824 = vpop.f32.mrf.mxu0
    %825 = vdwg.mxu0
    %v826 = vmax.f32 %v823, 0.0
    %v827 = vsel %vm119, %v826, %v823
    %828 = vst [vmem:[#allocation11 + $0x1] sm:$0x1] %v827
    %v829 = vpack.c.bf16 %v681, %v681
    %830 = vmatprep.subr.bf16.mxu0 0
    %831 = vmatpush1.bf16.msra.mxu0 %v385
    %832 = vmatprep.subr.bf16.mxu0 0
    %833 = vmatpush1.bf16.msra.mxu0 %v384
    %834 = vmatprep.subr.bf16.mxu0 0
    %835 = vmatpush1.bf16.msra.mxu0 %v383
    %836 = vmatprep.subr.bf16.mxu0 0
    %837 = vmatpush1.bf16.msra.mxu0 %v382
    %838 = vmatprep.subr.bf16.mxu0 0
    %839 = vmatpush1.bf16.msra.mxu0 %v381
    %840 = vmatprep.subr.bf16.mxu0 0
    %841 = vmatpush1.bf16.msra.mxu0 %v380
    %842 = vmatprep.subr.bf16.mxu0 0
    %843 = vmatpush1.bf16.msra.mxu0 %v379
    %844 = vmatprep.subr.bf16.mxu0 0
    %845 = vmatpush1.bf16.msra.mxu0 %v378
    %846 = vmatprep.subr.bf16.mxu0 0
    %847 = vmatpush2.bf16.msra.mxu0 0
    %848 = vmatprep.subr.bf16.mxu0 0
    %849 = vmatpush2.bf16.msra.mxu0 0
    %850 = vmatprep.subr.bf16.mxu0 0
    %851 = vmatpush2.bf16.msra.mxu0 0
    %852 = vmatprep.subr.bf16.mxu0 0
    %853 = vmatpush2.bf16.msra.mxu0 0
    %854 = vmatprep.subr.bf16.mxu0 0
    %855 = vmatpush2.bf16.msra.mxu0 0
    %856 = vmatprep.subr.bf16.mxu0 0
    %857 = vmatpush2.bf16.msra.mxu0 0
    %858 = vmatprep.subr.bf16.mxu0 0
    %859 = vmatpush2.bf16.msra.mxu0 0
    %860 = vmatprep.subr.bf16.mxu0 0
    %861 = vmatpush2.bf16.msra.mxu0 0
    %862 = vmatprep.mubr.bf16.mxu0 0
    %863 = vmatmul.mubr.bf16.gmra.mxu0 %v829
    %v864 = vpop.f32.mrf.mxu0
    %v865 = vadd.f32 0.0, %v864
    %v866 = vpop.f32.mrf.mxu0
    %v867 = vpop.f32.mrf.mxu0
    %v868 = vpop.f32.mrf.mxu0
    %869 = vdwg.mxu0
    %v871 = vrot.slane %v865, 6
    %v873 = vadd.f32 %v361, %v871
    %v874 = vtanh.pop %v873
    %v875 = vmul.f32 %v114, %v874
    %v876 = vadd.f32 %v875, %v115
    %v878 = vrot.slane %v876, 2
    %880 = vrot.lane.b32.xlu0 %v878, 96
    %v881 = vpop.permute.xlu0 %880
    %882 = vrot.lane.b32.xlu0 %v878, 64
    %v883 = vpop.permute.xlu0 %882
    %884 = vrot.lane.b32.xlu0 %v878, 32
    %v885 = vpop.permute.xlu0 %884
    %v886 = vmul.f32 %v881, %v679
    %v888 = vrot.slane %v883, 6
    %v890 = vmul.f32 %v876, %v888
    %v892 = vrot.slane %v890, 2
    %v894 = vadd.f32 %v886, %v892
    %v895 = vtanh.pop %v894
    %v896 = vmul.f32 %v885, %v895
    %897 = vmatprep.subr.mxu0 0.0
    %898 = vmatpush1.msra.mxu0 %v401
    %899 = vmatprep.subr.mxu0 0.0
    %900 = vmatpush1.msra.mxu0 %v400
    %901 = vmatprep.subr.mxu0 0.0
    %902 = vmatpush1.msra.mxu0 %v399
    %903 = vmatprep.subr.mxu0 0.0
    %904 = vmatpush1.msra.mxu0 %v398
    %905 = vmatprep.subr.mxu0 0.0
    %906 = vmatpush1.msra.mxu0 %v397
    %907 = vmatprep.subr.mxu0 0.0
    %908 = vmatpush1.msra.mxu0 %v396
    %909 = vmatprep.subr.mxu0 0.0
    %910 = vmatpush1.msra.mxu0 %v395
    %911 = vmatprep.subr.mxu0 0.0
    %912 = vmatpush1.msra.mxu0 %v394
    %913 = vmatprep.subr.mxu0 0.0
    %914 = vmatpush1.msra.mxu0 %v393
    %915 = vmatprep.subr.mxu0 0.0
    %916 = vmatpush1.msra.mxu0 %v392
    %917 = vmatprep.subr.mxu0 0.0
    %918 = vmatpush1.msra.mxu0 %v391
    %919 = vmatprep.subr.mxu0 0.0
    %920 = vmatpush1.msra.mxu0 %v390
    %921 = vmatprep.subr.mxu0 0.0
    %922 = vmatpush1.msra.mxu0 %v389
    %923 = vmatprep.subr.mxu0 0.0
    %924 = vmatpush1.msra.mxu0 %v388
    %925 = vmatprep.subr.mxu0 0.0
    %926 = vmatpush1.msra.mxu0 %v387
    %927 = vmatprep.subr.mxu0 0.0
    %928 = vmatpush1.msra.mxu0 %v386
    %929 = vmatprep.subr.mxu0 0.0
    %930 = vmatpush2.msra.mxu0 0.0
    %931 = vmatprep.subr.mxu0 0.0
    %932 = vmatpush2.msra.mxu0 0.0
    %933 = vmatprep.subr.mxu0 0.0
    %934 = vmatpush2.msra.mxu0 0.0
    %935 = vmatprep.subr.mxu0 0.0
    %936 = vmatpush2.msra.mxu0 0.0
    %937 = vmatprep.subr.mxu0 0.0
    %938 = vmatpush2.msra.mxu0 0.0
    %939 = vmatprep.subr.mxu0 0.0
    %940 = vmatpush2.msra.mxu0 0.0
    %941 = vmatprep.subr.mxu0 0.0
    %942 = vmatpush2.msra.mxu0 0.0
    %943 = vmatprep.subr.mxu0 0.0
    %944 = vmatpush2.msra.mxu0 0.0
    %945 = vmatprep.subr.mxu0 0.0
    %946 = vmatpush2.msra.mxu0 0.0
    %947 = vmatprep.subr.mxu0 0.0
    %948 = vmatpush2.msra.mxu0 0.0
    %949 = vmatprep.subr.mxu0 0.0
    %950 = vmatpush2.msra.mxu0 0.0
    %951 = vmatprep.subr.mxu0 0.0
    %952 = vmatpush2.msra.mxu0 0.0
    %953 = vmatprep.subr.mxu0 0.0
    %954 = vmatpush2.msra.mxu0 0.0
    %955 = vmatprep.subr.mxu0 0.0
    %956 = vmatpush2.msra.mxu0 0.0
    %957 = vmatprep.subr.mxu0 0.0
    %958 = vmatpush2.msra.mxu0 0.0
    %959 = vmatprep.subr.mxu0 0.0
    %960 = vmatpush2.msra.mxu0 0.0
    %961 = vmatprep.mubr.f32.mxu0 0.0
    %962 = vmatmul.mubr.f32.gmra.mxu0 %v896
    %v963 = vpop.f32.mrf.mxu0
    %v964 = vadd.f32 %v402, %v963
    %v965 = vpop.f32.mrf.mxu0
    %966 = vdwg.mxu0
    %v967 = vmax.f32 %v964, 0.0
    %v969 = vsel %vm537, %v967, 0
    %971 = vmatprep.subr.mxu0 0.0
    %972 = vmatpush1.msra.mxu0 0.0
    %973 = vmatprep.subr.mxu0 0.0
    %974 = vmatpush1.msra.mxu0 0.0
    %975 = vmatprep.subr.mxu0 0.0
    %976 = vmatpush1.msra.mxu0 0.0
    %977 = vmatprep.subr.mxu0 0.0
    %978 = vmatpush1.msra.mxu0 0.0
    %979 = vmatprep.subr.mxu0 0.0
    %980 = vmatpush1.msra.mxu0 0.0
    %981 = vmatprep.subr.mxu0 0.0
    %982 = vmatpush1.msra.mxu0 0.0
    %983 = vmatprep.subr.mxu0 0.0
    %984 = vmatpush1.msra.mxu0 0.0
    %985 = vmatprep.subr.mxu0 0.0
    %986 = vmatpush1.msra.mxu0 0.0
    %987 = vmatprep.subr.mxu0 0.0
    %988 = vmatpush1.msra.mxu0 0.0
    %989 = vmatprep.subr.mxu0 0.0
    %990 = vmatpush1.msra.mxu0 0.0
    %991 = vmatprep.subr.mxu0 0.0
    %992 = vmatpush1.msra.mxu0 0.0
    %993 = vmatprep.subr.mxu0 0.0
    %994 = vmatpush1.msra.mxu0 0.0
    %995 = vmatprep.subr.mxu0 0.0
    %996 = vmatpush1.msra.mxu0 %v406
    %997 = vmatprep.subr.mxu0 0.0
    %998 = vmatpush1.msra.mxu0 %v405
    %999 = vmatprep.subr.mxu0 0.0
    %1000 = vmatpush1.msra.mxu0 %v404
    %1001 = vmatprep.subr.mxu0 0.0
    %1002 = vmatpush1.msra.mxu0 %v403
    %1003 = vmatprep.subr.mxu0 0.0
    %1004 = vmatpush2.msra.mxu0 0.0
    %1005 = vmatprep.subr.mxu0 0.0
    %1006 = vmatpush2.msra.mxu0 0.0
    %1007 = vmatprep.subr.mxu0 0.0
    %1008 = vmatpush2.msra.mxu0 0.0
    %1009 = vmatprep.subr.mxu0 0.0
    %1010 = vmatpush2.msra.mxu0 0.0
    %1011 = vmatprep.subr.mxu0 0.0
    %1012 = vmatpush2.msra.mxu0 0.0
    %1013 = vmatprep.subr.mxu0 0.0
    %1014 = vmatpush2.msra.mxu0 0.0
    %1015 = vmatprep.subr.mxu0 0.0
    %1016 = vmatpush2.msra.mxu0 0.0
    %1017 = vmatprep.subr.mxu0 0.0
    %1018 = vmatpush2.msra.mxu0 0.0
    %1019 = vmatprep.subr.mxu0 0.0
    %1020 = vmatpush2.msra.mxu0 0.0
    %1021 = vmatprep.subr.mxu0 0.0
    %1022 = vmatpush2.msra.mxu0 0.0
    %1023 = vmatprep.subr.mxu0 0.0
    %1024 = vmatpush2.msra.mxu0 0.0
    %1025 = vmatprep.subr.mxu0 0.0
    %1026 = vmatpush2.msra.mxu0 0.0
    %1027 = vmatprep.subr.mxu0 0.0
    %1028 = vmatpush2.msra.mxu0 0.0
    %1029 = vmatprep.subr.mxu0 0.0
    %1030 = vmatpush2.msra.mxu0 0.0
    %1031 = vmatprep.subr.mxu0 0.0
    %1032 = vmatpush2.msra.mxu0 0.0
    %1033 = vmatprep.subr.mxu0 0.0
    %1034 = vmatpush2.msra.mxu0 0.0
    %1035 = vmatprep.mubr.f32.mxu0 0.0
    %1036 = vmatmul.mubr.f32.gmra.mxu0 %v969
    %v1037 = vpop.f32.mrf.mxu0
    %v1038 = vadd.f32 %v407, %v1037
    %v1039 = vpop.f32.mrf.mxu0
    %1040 = vdwg.mxu0
    %v1041 = vmax.f32 %v1038, 0.0
    %v1042 = vsel %vm119, %v1041, %v1038
    %1043 = vst [vmem:[#allocation11 + $0x2] sm:$0x1] %v1042
    %v1044 = vpack.c.bf16 %v896, %v896
    %1045 = vmatprep.subr.bf16.mxu0 0
    %1046 = vmatpush1.bf16.msra.mxu0 %v385
    %1047 = vmatprep.subr.bf16.mxu0 0
    %1048 = vmatpush1.bf16.msra.mxu0 %v384
    %1049 = vmatprep.subr.bf16.mxu0 0
    %1050 = vmatpush1.bf16.msra.mxu0 %v383
    %1051 = vmatprep.subr.bf16.mxu0 0
    %1052 = vmatpush1.bf16.msra.mxu0 %v382
    %1053 = vmatprep.subr.bf16.mxu0 0
    %1054 = vmatpush1.bf16.msra.mxu0 %v381
    %1055 = vmatprep.subr.bf16.mxu0 0
    %1056 = vmatpush1.bf16.msra.mxu0 %v380
    %1057 = vmatprep.subr.bf16.mxu0 0
    %1058 = vmatpush1.bf16.msra.mxu0 %v379
    %1059 = vmatprep.subr.bf16.mxu0 0
    %1060 = vmatpush1.bf16.msra.mxu0 %v378
    %1061 = vmatprep.subr.bf16.mxu0 0
    %1062 = vmatpush2.bf16.msra.mxu0 0
    %1063 = vmatprep.subr.bf16.mxu0 0
    %1064 = vmatpush2.bf16.msra.mxu0 0
    %1065 = vmatprep.subr.bf16.mxu0 0
    %1066 = vmatpush2.bf16.msra.mxu0 0
    %1067 = vmatprep.subr.bf16.mxu0 0
    %1068 = vmatpush2.bf16.msra.mxu0 0
    %1069 = vmatprep.subr.bf16.mxu0 0
    %1070 = vmatpush2.bf16.msra.mxu0 0
    %1071 = vmatprep.subr.bf16.mxu0 0
    %1072 = vmatpush2.bf16.msra.mxu0 0
    %1073 = vmatprep.subr.bf16.mxu0 0
    %1074 = vmatpush2.bf16.msra.mxu0 0
    %1075 = vmatprep.subr.bf16.mxu0 0
    %1076 = vmatpush2.bf16.msra.mxu0 0
    %1077 = vmatprep.mubr.bf16.mxu0 0
    %1078 = vmatmul.mubr.bf16.gmra.mxu0 %v1044
    %v1079 = vpop.f32.mrf.mxu0
    %v1080 = vadd.f32 0.0, %v1079
    %v1081 = vpop.f32.mrf.mxu0
    %v1082 = vpop.f32.mrf.mxu0
    %v1083 = vpop.f32.mrf.mxu0
    %1084 = vdwg.mxu0
    %v1086 = vrot.slane %v1080, 5
    %v1088 = vadd.f32 %v361, %v1086
    %v1089 = vtanh.pop %v1088
    %v1090 = vmul.f32 %v114, %v1089
    %v1091 = vadd.f32 %v1090, %v115
    %v1093 = vrot.slane %v1091, 3
    %1095 = vrot.lane.b32.xlu0 %v1093, 96
    %v1096 = vpop.permute.xlu0 %1095
    %1097 = vrot.lane.b32.xlu0 %v1093, 64
    %v1098 = vpop.permute.xlu0 %1097
    %1099 = vrot.lane.b32.xlu0 %v1093, 32
    %v1100 = vpop.permute.xlu0 %1099
    %v1101 = vmul.f32 %v1096, %v894
    %v1103 = vrot.slane %v1098, 5
    %v1105 = vmul.f32 %v1091, %v1103
    %v1107 = vrot.slane %v1105, 3
    %v1109 = vadd.f32 %v1101, %v1107
    %v1110 = vtanh.pop %v1109
    %v1111 = vmul.f32 %v1100, %v1110
    %1112 = vmatprep.subr.mxu0 0.0
    %1113 = vmatpush1.msra.mxu0 %v401
    %1114 = vmatprep.subr.mxu0 0.0
    %1115 = vmatpush1.msra.mxu0 %v400
    %1116 = vmatprep.subr.mxu0 0.0
    %1117 = vmatpush1.msra.mxu0 %v399
    %1118 = vmatprep.subr.mxu0 0.0
    %1119 = vmatpush1.msra.mxu0 %v398
    %1120 = vmatprep.subr.mxu0 0.0
    %1121 = vmatpush1.msra.mxu0 %v397
    %1122 = vmatprep.subr.mxu0 0.0
    %1123 = vmatpush1.msra.mxu0 %v396
    %1124 = vmatprep.subr.mxu0 0.0
    %1125 = vmatpush1.msra.mxu0 %v395
    %1126 = vmatprep.subr.mxu0 0.0
    %1127 = vmatpush1.msra.mxu0 %v394
    %1128 = vmatprep.subr.mxu0 0.0
    %1129 = vmatpush1.msra.mxu0 %v393
    %1130 = vmatprep.subr.mxu0 0.0
    %1131 = vmatpush1.msra.mxu0 %v392
    %1132 = vmatprep.subr.mxu0 0.0
    %1133 = vmatpush1.msra.mxu0 %v391
    %1134 = vmatprep.subr.mxu0 0.0
    %1135 = vmatpush1.msra.mxu0 %v390
    %1136 = vmatprep.subr.mxu0 0.0
    %1137 = vmatpush1.msra.mxu0 %v389
    %1138 = vmatprep.subr.mxu0 0.0
    %1139 = vmatpush1.msra.mxu0 %v388
    %1140 = vmatprep.subr.mxu0 0.0
    %1141 = vmatpush1.msra.mxu0 %v387
    %1142 = vmatprep.subr.mxu0 0.0
    %1143 = vmatpush1.msra.mxu0 %v386
    %1144 = vmatprep.subr.mxu0 0.0
    %1145 = vmatpush2.msra.mxu0 0.0
    %1146 = vmatprep.subr.mxu0 0.0
    %1147 = vmatpush2.msra.mxu0 0.0
    %1148 = vmatprep.subr.mxu0 0.0
    %1149 = vmatpush2.msra.mxu0 0.0
    %1150 = vmatprep.subr.mxu0 0.0
    %1151 = vmatpush2.msra.mxu0 0.0
    %1152 = vmatprep.subr.mxu0 0.0
    %1153 = vmatpush2.msra.mxu0 0.0
    %1154 = vmatprep.subr.mxu0 0.0
    %1155 = vmatpush2.msra.mxu0 0.0
    %1156 = vmatprep.subr.mxu0 0.0
    %1157 = vmatpush2.msra.mxu0 0.0
    %1158 = vmatprep.subr.mxu0 0.0
    %1159 = vmatpush2.msra.mxu0 0.0
    %1160 = vmatprep.subr.mxu0 0.0
    %1161 = vmatpush2.msra.mxu0 0.0
    %1162 = vmatprep.subr.mxu0 0.0
    %1163 = vmatpush2.msra.mxu0 0.0
    %1164 = vmatprep.subr.mxu0 0.0
    %1165 = vmatpush2.msra.mxu0 0.0
    %1166 = vmatprep.subr.mxu0 0.0
    %1167 = vmatpush2.msra.mxu0 0.0
    %1168 = vmatprep.subr.mxu0 0.0
    %1169 = vmatpush2.msra.mxu0 0.0
    %1170 = vmatprep.subr.mxu0 0.0
    %1171 = vmatpush2.msra.mxu0 0.0
    %1172 = vmatprep.subr.mxu0 0.0
    %1173 = vmatpush2.msra.mxu0 0.0
    %1174 = vmatprep.subr.mxu0 0.0
    %1175 = vmatpush2.msra.mxu0 0.0
    %1176 = vmatprep.mubr.f32.mxu0 0.0
    %1177 = vmatmul.mubr.f32.gmra.mxu0 %v1111
    %v1178 = vpop.f32.mrf.mxu0
    %v1179 = vadd.f32 %v402, %v1178
    %v1180 = vpop.f32.mrf.mxu0
    %1181 = vdwg.mxu0
    %v1182 = vmax.f32 %v1179, 0.0
    %v1184 = vsel %vm537, %v1182, 0
    %1186 = vmatprep.subr.mxu0 0.0
    %1187 = vmatpush1.msra.mxu0 0.0
    %1188 = vmatprep.subr.mxu0 0.0
    %1189 = vmatpush1.msra.mxu0 0.0
    %1190 = vmatprep.subr.mxu0 0.0
    %1191 = vmatpush1.msra.mxu0 0.0
    %1192 = vmatprep.subr.mxu0 0.0
    %1193 = vmatpush1.msra.mxu0 0.0
    %1194 = vmatprep.subr.mxu0 0.0
    %1195 = vmatpush1.msra.mxu0 0.0
    %1196 = vmatprep.subr.mxu0 0.0
    %1197 = vmatpush1.msra.mxu0 0.0
    %1198 = vmatprep.subr.mxu0 0.0
    %1199 = vmatpush1.msra.mxu0 0.0
    %1200 = vmatprep.subr.mxu0 0.0
    %1201 = vmatpush1.msra.mxu0 0.0
    %1202 = vmatprep.subr.mxu0 0.0
    %1203 = vmatpush1.msra.mxu0 0.0
    %1204 = vmatprep.subr.mxu0 0.0
    %1205 = vmatpush1.msra.mxu0 0.0
    %1206 = vmatprep.subr.mxu0 0.0
    %1207 = vmatpush1.msra.mxu0 0.0
    %1208 = vmatprep.subr.mxu0 0.0
    %1209 = vmatpush1.msra.mxu0 0.0
    %1210 = vmatprep.subr.mxu0 0.0
    %1211 = vmatpush1.msra.mxu0 %v406
    %1212 = vmatprep.subr.mxu0 0.0
    %1213 = vmatpush1.msra.mxu0 %v405
    %1214 = vmatprep.subr.mxu0 0.0
    %1215 = vmatpush1.msra.mxu0 %v404
    %1216 = vmatprep.subr.mxu0 0.0
    %1217 = vmatpush1.msra.mxu0 %v403
    %1218 = vmatprep.subr.mxu0 0.0
    %1219 = vmatpush2.msra.mxu0 0.0
    %1220 = vmatprep.subr.mxu0 0.0
    %1221 = vmatpush2.msra.mxu0 0.0
    %1222 = vmatprep.subr.mxu0 0.0
    %1223 = vmatpush2.msra.mxu0 0.0
    %1224 = vmatprep.subr.mxu0 0.0
    %1225 = vmatpush2.msra.mxu0 0.0
    %1226 = vmatprep.subr.mxu0 0.0
    %1227 = vmatpush2.msra.mxu0 0.0
    %1228 = vmatprep.subr.mxu0 0.0
    %1229 = vmatpush2.msra.mxu0 0.0
    %1230 = vmatprep.subr.mxu0 0.0
    %1231 = vmatpush2.msra.mxu0 0.0
    %1232 = vmatprep.subr.mxu0 0.0
    %1233 = vmatpush2.msra.mxu0 0.0
    %1234 = vmatprep.subr.mxu0 0.0
    %1235 = vmatpush2.msra.mxu0 0.0
    %1236 = vmatprep.subr.mxu0 0.0
    %1237 = vmatpush2.msra.mxu0 0.0
    %1238 = vmatprep.subr.mxu0 0.0
    %1239 = vmatpush2.msra.mxu0 0.0
    %1240 = vmatprep.subr.mxu0 0.0
    %1241 = vmatpush2.msra.mxu0 0.0
    %1242 = vmatprep.subr.mxu0 0.0
    %1243 = vmatpush2.msra.mxu0 0.0
    %1244 = vmatprep.subr.mxu0 0.0
    %1245 = vmatpush2.msra.mxu0 0.0
    %1246 = vmatprep.subr.mxu0 0.0
    %1247 = vmatpush2.msra.mxu0 0.0
    %1248 = vmatprep.subr.mxu0 0.0
    %1249 = vmatpush2.msra.mxu0 0.0
    %1250 = vmatprep.mubr.f32.mxu0 0.0
    %1251 = vmatmul.mubr.f32.gmra.mxu0 %v1184
    %v1252 = vpop.f32.mrf.mxu0
    %v1253 = vadd.f32 %v407, %v1252
    %v1254 = vpop.f32.mrf.mxu0
    %1255 = vdwg.mxu0
    %v1256 = vmax.f32 %v1253, 0.0
    %v1257 = vsel %vm119, %v1256, %v1253
    %1258 = vst [vmem:[#allocation11 + $0x3] sm:$0x1] %v1257
    %v1259 = vpack.c.bf16 %v1111, %v1111
    %1260 = vmatprep.subr.bf16.mxu0 0
    %1261 = vmatpush1.bf16.msra.mxu0 %v385
    %1262 = vmatprep.subr.bf16.mxu0 0
    %1263 = vmatpush1.bf16.msra.mxu0 %v384
    %1264 = vmatprep.subr.bf16.mxu0 0
    %1265 = vmatpush1.bf16.msra.mxu0 %v383
    %1266 = vmatprep.subr.bf16.mxu0 0
    %1267 = vmatpush1.bf16.msra.mxu0 %v382
    %1268 = vmatprep.subr.bf16.mxu0 0
    %1269 = vmatpush1.bf16.msra.mxu0 %v381
    %1270 = vmatprep.subr.bf16.mxu0 0
    %1271 = vmatpush1.bf16.msra.mxu0 %v380
    %1272 = vmatprep.subr.bf16.mxu0 0
    %1273 = vmatpush1.bf16.msra.mxu0 %v379
    %1274 = vmatprep.subr.bf16.mxu0 0
    %1275 = vmatpush1.bf16.msra.mxu0 %v378
    %1276 = vmatprep.subr.bf16.mxu0 0
    %1277 = vmatpush2.bf16.msra.mxu0 0
    %1278 = vmatprep.subr.bf16.mxu0 0
    %1279 = vmatpush2.bf16.msra.mxu0 0
    %1280 = vmatprep.subr.bf16.mxu0 0
    %1281 = vmatpush2.bf16.msra.mxu0 0
    %1282 = vmatprep.subr.bf16.mxu0 0
    %1283 = vmatpush2.bf16.msra.mxu0 0
    %1284 = vmatprep.subr.bf16.mxu0 0
    %1285 = vmatpush2.bf16.msra.mxu0 0
    %1286 = vmatprep.subr.bf16.mxu0 0
    %1287 = vmatpush2.bf16.msra.mxu0 0
    %1288 = vmatprep.subr.bf16.mxu0 0
    %1289 = vmatpush2.bf16.msra.mxu0 0
    %1290 = vmatprep.subr.bf16.mxu0 0
    %1291 = vmatpush2.bf16.msra.mxu0 0
    %1292 = vmatprep.mubr.bf16.mxu0 0
    %1293 = vmatmul.mubr.bf16.gmra.mxu0 %v1259
    %v1294 = vpop.f32.mrf.mxu0
    %v1295 = vadd.f32 0.0, %v1294
    %v1296 = vpop.f32.mrf.mxu0
    %v1297 = vpop.f32.mrf.mxu0
    %v1298 = vpop.f32.mrf.mxu0
    %1299 = vdwg.mxu0
    %v1301 = vrot.slane %v1295, 4
    %v1303 = vadd.f32 %v361, %v1301
    %v1304 = vtanh.pop %v1303
    %v1305 = vmul.f32 %v114, %v1304
    %v1306 = vadd.f32 %v1305, %v115
    %v1308 = vrot.slane %v1306, 4
    %1310 = vrot.lane.b32.xlu0 %v1308, 96
    %v1311 = vpop.permute.xlu0 %1310
    %1312 = vrot.lane.b32.xlu0 %v1308, 64
    %v1313 = vpop.permute.xlu0 %1312
    %1314 = vrot.lane.b32.xlu0 %v1308, 32
    %v1315 = vpop.permute.xlu0 %1314
    %v1316 = vmul.f32 %v1311, %v1109
    %v1318 = vrot.slane %v1313, 4
    %v1320 = vmul.f32 %v1306, %v1318
    %v1322 = vrot.slane %v1320, 4
    %v1324 = vadd.f32 %v1316, %v1322
    %v1325 = vtanh.pop %v1324
    %v1326 = vmul.f32 %v1315, %v1325
    %1327 = vmatprep.subr.mxu0 0.0
    %1328 = vmatpush1.msra.mxu0 %v401
    %1329 = vmatprep.subr.mxu0 0.0
    %1330 = vmatpush1.msra.mxu0 %v400
    %1331 = vmatprep.subr.mxu0 0.0
    %1332 = vmatpush1.msra.mxu0 %v399
    %1333 = vmatprep.subr.mxu0 0.0
    %1334 = vmatpush1.msra.mxu0 %v398
    %1335 = vmatprep.subr.mxu0 0.0
    %1336 = vmatpush1.msra.mxu0 %v397
    %1337 = vmatprep.subr.mxu0 0.0
    %1338 = vmatpush1.msra.mxu0 %v396
    %1339 = vmatprep.subr.mxu0 0.0
    %1340 = vmatpush1.msra.mxu0 %v395
    %1341 = vmatprep.subr.mxu0 0.0
    %1342 = vmatpush1.msra.mxu0 %v394
    %1343 = vmatprep.subr.mxu0 0.0
    %1344 = vmatpush1.msra.mxu0 %v393
    %1345 = vmatprep.subr.mxu0 0.0
    %1346 = vmatpush1.msra.mxu0 %v392
    %1347 = vmatprep.subr.mxu0 0.0
    %1348 = vmatpush1.msra.mxu0 %v391
    %1349 = vmatprep.subr.mxu0 0.0
    %1350 = vmatpush1.msra.mxu0 %v390
    %1351 = vmatprep.subr.mxu0 0.0
    %1352 = vmatpush1.msra.mxu0 %v389
    %1353 = vmatprep.subr.mxu0 0.0
    %1354 = vmatpush1.msra.mxu0 %v388
    %1355 = vmatprep.subr.mxu0 0.0
    %1356 = vmatpush1.msra.mxu0 %v387
    %1357 = vmatprep.subr.mxu0 0.0
    %1358 = vmatpush1.msra.mxu0 %v386
    %1359 = vmatprep.subr.mxu0 0.0
    %1360 = vmatpush2.msra.mxu0 0.0
    %1361 = vmatprep.subr.mxu0 0.0
    %1362 = vmatpush2.msra.mxu0 0.0
    %1363 = vmatprep.subr.mxu0 0.0
    %1364 = vmatpush2.msra.mxu0 0.0
    %1365 = vmatprep.subr.mxu0 0.0
    %1366 = vmatpush2.msra.mxu0 0.0
    %1367 = vmatprep.subr.mxu0 0.0
    %1368 = vmatpush2.msra.mxu0 0.0
    %1369 = vmatprep.subr.mxu0 0.0
    %1370 = vmatpush2.msra.mxu0 0.0
    %1371 = vmatprep.subr.mxu0 0.0
    %1372 = vmatpush2.msra.mxu0 0.0
    %1373 = vmatprep.subr.mxu0 0.0
    %1374 = vmatpush2.msra.mxu0 0.0
    %1375 = vmatprep.subr.mxu0 0.0
    %1376 = vmatpush2.msra.mxu0 0.0
    %1377 = vmatprep.subr.mxu0 0.0
    %1378 = vmatpush2.msra.mxu0 0.0
    %1379 = vmatprep.subr.mxu0 0.0
    %1380 = vmatpush2.msra.mxu0 0.0
    %1381 = vmatprep.subr.mxu0 0.0
    %1382 = vmatpush2.msra.mxu0 0.0
    %1383 = vmatprep.subr.mxu0 0.0
    %1384 = vmatpush2.msra.mxu0 0.0
    %1385 = vmatprep.subr.mxu0 0.0
    %1386 = vmatpush2.msra.mxu0 0.0
    %1387 = vmatprep.subr.mxu0 0.0
    %1388 = vmatpush2.msra.mxu0 0.0
    %1389 = vmatprep.subr.mxu0 0.0
    %1390 = vmatpush2.msra.mxu0 0.0
    %1391 = vmatprep.mubr.f32.mxu0 0.0
    %1392 = vmatmul.mubr.f32.gmra.mxu0 %v1326
    %v1393 = vpop.f32.mrf.mxu0
    %v1394 = vadd.f32 %v402, %v1393
    %v1395 = vpop.f32.mrf.mxu0
    %1396 = vdwg.mxu0
    %v1397 = vmax.f32 %v1394, 0.0
    %v1399 = vsel %vm537, %v1397, 0
    %1401 = vmatprep.subr.mxu0 0.0
    %1402 = vmatpush1.msra.mxu0 0.0
    %1403 = vmatprep.subr.mxu0 0.0
    %1404 = vmatpush1.msra.mxu0 0.0
    %1405 = vmatprep.subr.mxu0 0.0
    %1406 = vmatpush1.msra.mxu0 0.0
    %1407 = vmatprep.subr.mxu0 0.0
    %1408 = vmatpush1.msra.mxu0 0.0
    %1409 = vmatprep.subr.mxu0 0.0
    %1410 = vmatpush1.msra.mxu0 0.0
    %1411 = vmatprep.subr.mxu0 0.0
    %1412 = vmatpush1.msra.mxu0 0.0
    %1413 = vmatprep.subr.mxu0 0.0
    %1414 = vmatpush1.msra.mxu0 0.0
    %1415 = vmatprep.subr.mxu0 0.0
    %1416 = vmatpush1.msra.mxu0 0.0
    %1417 = vmatprep.subr.mxu0 0.0
    %1418 = vmatpush1.msra.mxu0 0.0
    %1419 = vmatprep.subr.mxu0 0.0
    %1420 = vmatpush1.msra.mxu0 0.0
    %1421 = vmatprep.subr.mxu0 0.0
    %1422 = vmatpush1.msra.mxu0 0.0
    %1423 = vmatprep.subr.mxu0 0.0
    %1424 = vmatpush1.msra.mxu0 0.0
    %1425 = vmatprep.subr.mxu0 0.0
    %1426 = vmatpush1.msra.mxu0 %v406
    %1427 = vmatprep.subr.mxu0 0.0
    %1428 = vmatpush1.msra.mxu0 %v405
    %1429 = vmatprep.subr.mxu0 0.0
    %1430 = vmatpush1.msra.mxu0 %v404
    %1431 = vmatprep.subr.mxu0 0.0
    %1432 = vmatpush1.msra.mxu0 %v403
    %1433 = vmatprep.subr.mxu0 0.0
    %1434 = vmatpush2.msra.mxu0 0.0
    %1435 = vmatprep.subr.mxu0 0.0
    %1436 = vmatpush2.msra.mxu0 0.0
    %1437 = vmatprep.subr.mxu0 0.0
    %1438 = vmatpush2.msra.mxu0 0.0
    %1439 = vmatprep.subr.mxu0 0.0
    %1440 = vmatpush2.msra.mxu0 0.0
    %1441 = vmatprep.subr.mxu0 0.0
    %1442 = vmatpush2.msra.mxu0 0.0
    %1443 = vmatprep.subr.mxu0 0.0
    %1444 = vmatpush2.msra.mxu0 0.0
    %1445 = vmatprep.subr.mxu0 0.0
    %1446 = vmatpush2.msra.mxu0 0.0
    %1447 = vmatprep.subr.mxu0 0.0
    %1448 = vmatpush2.msra.mxu0 0.0
    %1449 = vmatprep.subr.mxu0 0.0
    %1450 = vmatpush2.msra.mxu0 0.0
    %1451 = vmatprep.subr.mxu0 0.0
    %1452 = vmatpush2.msra.mxu0 0.0
    %1453 = vmatprep.subr.mxu0 0.0
    %1454 = vmatpush2.msra.mxu0 0.0
    %1455 = vmatprep.subr.mxu0 0.0
    %1456 = vmatpush2.msra.mxu0 0.0
    %1457 = vmatprep.subr.mxu0 0.0
    %1458 = vmatpush2.msra.mxu0 0.0
    %1459 = vmatprep.subr.mxu0 0.0
    %1460 = vmatpush2.msra.mxu0 0.0
    %1461 = vmatprep.subr.mxu0 0.0
    %1462 = vmatpush2.msra.mxu0 0.0
    %1463 = vmatprep.subr.mxu0 0.0
    %1464 = vmatpush2.msra.mxu0 0.0
    %1465 = vmatprep.mubr.f32.mxu0 0.0
    %1466 = vmatmul.mubr.f32.gmra.mxu0 %v1399
    %v1467 = vpop.f32.mrf.mxu0
    %v1468 = vadd.f32 %v407, %v1467
    %v1469 = vpop.f32.mrf.mxu0
    %1470 = vdwg.mxu0
    %v1471 = vmax.f32 %v1468, 0.0
    %v1472 = vsel %vm119, %v1471, %v1468
    %1473 = vst [vmem:[#allocation11 + $0x4] sm:$0x1] %v1472
    %v1474 = vpack.c.bf16 %v1326, %v1326
    %1475 = vmatprep.subr.bf16.mxu0 0
    %1476 = vmatpush1.bf16.msra.mxu0 %v385
    %1477 = vmatprep.subr.bf16.mxu0 0
    %1478 = vmatpush1.bf16.msra.mxu0 %v384
    %1479 = vmatprep.subr.bf16.mxu0 0
    %1480 = vmatpush1.bf16.msra.mxu0 %v383
    %1481 = vmatprep.subr.bf16.mxu0 0
    %1482 = vmatpush1.bf16.msra.mxu0 %v382
    %1483 = vmatprep.subr.bf16.mxu0 0
    %1484 = vmatpush1.bf16.msra.mxu0 %v381
    %1485 = vmatprep.subr.bf16.mxu0 0
    %1486 = vmatpush1.bf16.msra.mxu0 %v380
    %1487 = vmatprep.subr.bf16.mxu0 0
    %1488 = vmatpush1.bf16.msra.mxu0 %v379
    %1489 = vmatprep.subr.bf16.mxu0 0
    %1490 = vmatpush1.bf16.msra.mxu0 %v378
    %1491 = vmatprep.subr.bf16.mxu0 0
    %1492 = vmatpush2.bf16.msra.mxu0 0
    %1493 = vmatprep.subr.bf16.mxu0 0
    %1494 = vmatpush2.bf16.msra.mxu0 0
    %1495 = vmatprep.subr.bf16.mxu0 0
    %1496 = vmatpush2.bf16.msra.mxu0 0
    %1497 = vmatprep.subr.bf16.mxu0 0
    %1498 = vmatpush2.bf16.msra.mxu0 0
    %1499 = vmatprep.subr.bf16.mxu0 0
    %1500 = vmatpush2.bf16.msra.mxu0 0
    %1501 = vmatprep.subr.bf16.mxu0 0
    %1502 = vmatpush2.bf16.msra.mxu0 0
    %1503 = vmatprep.subr.bf16.mxu0 0
    %1504 = vmatpush2.bf16.msra.mxu0 0
    %1505 = vmatprep.subr.bf16.mxu0 0
    %1506 = vmatpush2.bf16.msra.mxu0 0
    %1507 = vmatprep.mubr.bf16.mxu0 0
    %1508 = vmatmul.mubr.bf16.gmra.mxu0 %v1474
    %v1509 = vpop.f32.mrf.mxu0
    %v1510 = vadd.f32 0.0, %v1509
    %v1511 = vpop.f32.mrf.mxu0
    %v1512 = vpop.f32.mrf.mxu0
    %v1513 = vpop.f32.mrf.mxu0
    %1514 = vdwg.mxu0
    %v1516 = vrot.slane %v1510, 3
    %v1518 = vadd.f32 %v361, %v1516
    %v1519 = vtanh.pop %v1518
    %v1520 = vmul.f32 %v114, %v1519
    %v1521 = vadd.f32 %v1520, %v115
    %v1523 = vrot.slane %v1521, 5
    %1525 = vrot.lane.b32.xlu0 %v1523, 96
    %v1526 = vpop.permute.xlu0 %1525
    %1527 = vrot.lane.b32.xlu0 %v1523, 64
    %v1528 = vpop.permute.xlu0 %1527
    %1529 = vrot.lane.b32.xlu0 %v1523, 32
    %v1530 = vpop.permute.xlu0 %1529
    %v1531 = vmul.f32 %v1526, %v1324
    %v1533 = vrot.slane %v1528, 3
    %v1535 = vmul.f32 %v1521, %v1533
    %v1537 = vrot.slane %v1535, 5
    %v1539 = vadd.f32 %v1531, %v1537
    %v1540 = vtanh.pop %v1539
    %v1541 = vmul.f32 %v1530, %v1540
    %1542 = vmatprep.subr.mxu0 0.0
    %1543 = vmatpush1.msra.mxu0 %v401
    %1544 = vmatprep.subr.mxu0 0.0
    %1545 = vmatpush1.msra.mxu0 %v400
    %1546 = vmatprep.subr.mxu0 0.0
    %1547 = vmatpush1.msra.mxu0 %v399
    %1548 = vmatprep.subr.mxu0 0.0
    %1549 = vmatpush1.msra.mxu0 %v398
    %1550 = vmatprep.subr.mxu0 0.0
    %1551 = vmatpush1.msra.mxu0 %v397
    %1552 = vmatprep.subr.mxu0 0.0
    %1553 = vmatpush1.msra.mxu0 %v396
    %1554 = vmatprep.subr.mxu0 0.0
    %1555 = vmatpush1.msra.mxu0 %v395
    %1556 = vmatprep.subr.mxu0 0.0
    %1557 = vmatpush1.msra.mxu0 %v394
    %1558 = vmatprep.subr.mxu0 0.0
    %1559 = vmatpush1.msra.mxu0 %v393
    %1560 = vmatprep.subr.mxu0 0.0
    %1561 = vmatpush1.msra.mxu0 %v392
    %1562 = vmatprep.subr.mxu0 0.0
    %1563 = vmatpush1.msra.mxu0 %v391
    %1564 = vmatprep.subr.mxu0 0.0
    %1565 = vmatpush1.msra.mxu0 %v390
    %1566 = vmatprep.subr.mxu0 0.0
    %1567 = vmatpush1.msra.mxu0 %v389
    %1568 = vmatprep.subr.mxu0 0.0
    %1569 = vmatpush1.msra.mxu0 %v388
    %1570 = vmatprep.subr.mxu0 0.0
    %1571 = vmatpush1.msra.mxu0 %v387
    %1572 = vmatprep.subr.mxu0 0.0
    %1573 = vmatpush1.msra.mxu0 %v386
    %1574 = vmatprep.subr.mxu0 0.0
    %1575 = vmatpush2.msra.mxu0 0.0
    %1576 = vmatprep.subr.mxu0 0.0
    %1577 = vmatpush2.msra.mxu0 0.0
    %1578 = vmatprep.subr.mxu0 0.0
    %1579 = vmatpush2.msra.mxu0 0.0
    %1580 = vmatprep.subr.mxu0 0.0
    %1581 = vmatpush2.msra.mxu0 0.0
    %1582 = vmatprep.subr.mxu0 0.0
    %1583 = vmatpush2.msra.mxu0 0.0
    %1584 = vmatprep.subr.mxu0 0.0
    %1585 = vmatpush2.msra.mxu0 0.0
    %1586 = vmatprep.subr.mxu0 0.0
    %1587 = vmatpush2.msra.mxu0 0.0
    %1588 = vmatprep.subr.mxu0 0.0
    %1589 = vmatpush2.msra.mxu0 0.0
    %1590 = vmatprep.subr.mxu0 0.0
    %1591 = vmatpush2.msra.mxu0 0.0
    %1592 = vmatprep.subr.mxu0 0.0
    %1593 = vmatpush2.msra.mxu0 0.0
    %1594 = vmatprep.subr.mxu0 0.0
    %1595 = vmatpush2.msra.mxu0 0.0
    %1596 = vmatprep.subr.mxu0 0.0
    %1597 = vmatpush2.msra.mxu0 0.0
    %1598 = vmatprep.subr.mxu0 0.0
    %1599 = vmatpush2.msra.mxu0 0.0
    %1600 = vmatprep.subr.mxu0 0.0
    %1601 = vmatpush2.msra.mxu0 0.0
    %1602 = vmatprep.subr.mxu0 0.0
    %1603 = vmatpush2.msra.mxu0 0.0
    %1604 = vmatprep.subr.mxu0 0.0
    %1605 = vmatpush2.msra.mxu0 0.0
    %1606 = vmatprep.mubr.f32.mxu0 0.0
    %1607 = vmatmul.mubr.f32.gmra.mxu0 %v1541
    %v1608 = vpop.f32.mrf.mxu0
    %v1609 = vadd.f32 %v402, %v1608
    %v1610 = vpop.f32.mrf.mxu0
    %1611 = vdwg.mxu0
    %v1612 = vmax.f32 %v1609, 0.0
    %v1614 = vsel %vm537, %v1612, 0
    %1616 = vmatprep.subr.mxu0 0.0
    %1617 = vmatpush1.msra.mxu0 0.0
    %1618 = vmatprep.subr.mxu0 0.0
    %1619 = vmatpush1.msra.mxu0 0.0
    %1620 = vmatprep.subr.mxu0 0.0
    %1621 = vmatpush1.msra.mxu0 0.0
    %1622 = vmatprep.subr.mxu0 0.0
    %1623 = vmatpush1.msra.mxu0 0.0
    %1624 = vmatprep.subr.mxu0 0.0
    %1625 = vmatpush1.msra.mxu0 0.0
    %1626 = vmatprep.subr.mxu0 0.0
    %1627 = vmatpush1.msra.mxu0 0.0
    %1628 = vmatprep.subr.mxu0 0.0
    %1629 = vmatpush1.msra.mxu0 0.0
    %1630 = vmatprep.subr.mxu0 0.0
    %1631 = vmatpush1.msra.mxu0 0.0
    %1632 = vmatprep.subr.mxu0 0.0
    %1633 = vmatpush1.msra.mxu0 0.0
    %1634 = vmatprep.subr.mxu0 0.0
    %1635 = vmatpush1.msra.mxu0 0.0
    %1636 = vmatprep.subr.mxu0 0.0
    %1637 = vmatpush1.msra.mxu0 0.0
    %1638 = vmatprep.subr.mxu0 0.0
    %1639 = vmatpush1.msra.mxu0 0.0
    %1640 = vmatprep.subr.mxu0 0.0
    %1641 = vmatpush1.msra.mxu0 %v406
    %1642 = vmatprep.subr.mxu0 0.0
    %1643 = vmatpush1.msra.mxu0 %v405
    %1644 = vmatprep.subr.mxu0 0.0
    %1645 = vmatpush1.msra.mxu0 %v404
    %1646 = vmatprep.subr.mxu0 0.0
    %1647 = vmatpush1.msra.mxu0 %v403
    %1648 = vmatprep.subr.mxu0 0.0
    %1649 = vmatpush2.msra.mxu0 0.0
    %1650 = vmatprep.subr.mxu0 0.0
    %1651 = vmatpush2.msra.mxu0 0.0
    %1652 = vmatprep.subr.mxu0 0.0
    %1653 = vmatpush2.msra.mxu0 0.0
    %1654 = vmatprep.subr.mxu0 0.0
    %1655 = vmatpush2.msra.mxu0 0.0
    %1656 = vmatprep.subr.mxu0 0.0
    %1657 = vmatpush2.msra.mxu0 0.0
    %1658 = vmatprep.subr.mxu0 0.0
    %1659 = vmatpush2.msra.mxu0 0.0
    %1660 = vmatprep.subr.mxu0 0.0
    %1661 = vmatpush2.msra.mxu0 0.0
    %1662 = vmatprep.subr.mxu0 0.0
    %1663 = vmatpush2.msra.mxu0 0.0
    %1664 = vmatprep.subr.mxu0 0.0
    %1665 = vmatpush2.msra.mxu0 0.0
    %1666 = vmatprep.subr.mxu0 0.0
    %1667 = vmatpush2.msra.mxu0 0.0
    %1668 = vmatprep.subr.mxu0 0.0
    %1669 = vmatpush2.msra.mxu0 0.0
    %1670 = vmatprep.subr.mxu0 0.0
    %1671 = vmatpush2.msra.mxu0 0.0
    %1672 = vmatprep.subr.mxu0 0.0
    %1673 = vmatpush2.msra.mxu0 0.0
    %1674 = vmatprep.subr.mxu0 0.0
    %1675 = vmatpush2.msra.mxu0 0.0
    %1676 = vmatprep.subr.mxu0 0.0
    %1677 = vmatpush2.msra.mxu0 0.0
    %1678 = vmatprep.subr.mxu0 0.0
    %1679 = vmatpush2.msra.mxu0 0.0
    %1680 = vmatprep.mubr.f32.mxu0 0.0
    %1681 = vmatmul.mubr.f32.gmra.mxu0 %v1614
    %v1682 = vpop.f32.mrf.mxu0
    %v1683 = vadd.f32 %v407, %v1682
    %v1684 = vpop.f32.mrf.mxu0
    %1685 = vdwg.mxu0
    %v1686 = vmax.f32 %v1683, 0.0
    %v1687 = vsel %vm119, %v1686, %v1683
    %1688 = vst [vmem:[#allocation11 + $0x5] sm:$0x1] %v1687
    %v1689 = vpack.c.bf16 %v1541, %v1541
    %1690 = vmatprep.subr.bf16.mxu0 0
    %1691 = vmatpush1.bf16.msra.mxu0 %v385
    %1692 = vmatprep.subr.bf16.mxu0 0
    %1693 = vmatpush1.bf16.msra.mxu0 %v384
    %1694 = vmatprep.subr.bf16.mxu0 0
    %1695 = vmatpush1.bf16.msra.mxu0 %v383
    %1696 = vmatprep.subr.bf16.mxu0 0
    %1697 = vmatpush1.bf16.msra.mxu0 %v382
    %1698 = vmatprep.subr.bf16.mxu0 0
    %1699 = vmatpush1.bf16.msra.mxu0 %v381
    %1700 = vmatprep.subr.bf16.mxu0 0
    %1701 = vmatpush1.bf16.msra.mxu0 %v380
    %1702 = vmatprep.subr.bf16.mxu0 0
    %1703 = vmatpush1.bf16.msra.mxu0 %v379
    %1704 = vmatprep.subr.bf16.mxu0 0
    %1705 = vmatpush1.bf16.msra.mxu0 %v378
    %1706 = vmatprep.subr.bf16.mxu0 0
    %1707 = vmatpush2.bf16.msra.mxu0 0
    %1708 = vmatprep.subr.bf16.mxu0 0
    %1709 = vmatpush2.bf16.msra.mxu0 0
    %1710 = vmatprep.subr.bf16.mxu0 0
    %1711 = vmatpush2.bf16.msra.mxu0 0
    %1712 = vmatprep.subr.bf16.mxu0 0
    %1713 = vmatpush2.bf16.msra.mxu0 0
    %1714 = vmatprep.subr.bf16.mxu0 0
    %1715 = vmatpush2.bf16.msra.mxu0 0
    %1716 = vmatprep.subr.bf16.mxu0 0
    %1717 = vmatpush2.bf16.msra.mxu0 0
    %1718 = vmatprep.subr.bf16.mxu0 0
    %1719 = vmatpush2.bf16.msra.mxu0 0
    %1720 = vmatprep.subr.bf16.mxu0 0
    %1721 = vmatpush2.bf16.msra.mxu0 0
    %1722 = vmatprep.mubr.bf16.mxu0 0
    %1723 = vmatmul.mubr.bf16.gmra.mxu0 %v1689
    %v1724 = vpop.f32.mrf.mxu0
    %v1725 = vadd.f32 0.0, %v1724
    %v1726 = vpop.f32.mrf.mxu0
    %v1727 = vpop.f32.mrf.mxu0
    %v1728 = vpop.f32.mrf.mxu0
    %1729 = vdwg.mxu0
    %v1731 = vrot.slane %v1725, 2
    %v1733 = vadd.f32 %v361, %v1731
    %v1734 = vtanh.pop %v1733
    %v1735 = vmul.f32 %v114, %v1734
    %v1736 = vadd.f32 %v1735, %v115
    %v1738 = vrot.slane %v1736, 6
    %1740 = vrot.lane.b32.xlu0 %v1738, 96
    %v1741 = vpop.permute.xlu0 %1740
    %1742 = vrot.lane.b32.xlu0 %v1738, 64
    %v1743 = vpop.permute.xlu0 %1742
    %1744 = vrot.lane.b32.xlu0 %v1738, 32
    %v1745 = vpop.permute.xlu0 %1744
    %v1746 = vmul.f32 %v1741, %v1539
    %v1748 = vrot.slane %v1743, 2
    %v1750 = vmul.f32 %v1736, %v1748
    %v1752 = vrot.slane %v1750, 6
    %v1754 = vadd.f32 %v1746, %v1752
    %v1755 = vtanh.pop %v1754
    %v1756 = vmul.f32 %v1745, %v1755
    %1757 = vmatprep.subr.mxu0 0.0
    %1758 = vmatpush1.msra.mxu0 %v401
    %1759 = vmatprep.subr.mxu0 0.0
    %1760 = vmatpush1.msra.mxu0 %v400
    %1761 = vmatprep.subr.mxu0 0.0
    %1762 = vmatpush1.msra.mxu0 %v399
    %1763 = vmatprep.subr.mxu0 0.0
    %1764 = vmatpush1.msra.mxu0 %v398
    %1765 = vmatprep.subr.mxu0 0.0
    %1766 = vmatpush1.msra.mxu0 %v397
    %1767 = vmatprep.subr.mxu0 0.0
    %1768 = vmatpush1.msra.mxu0 %v396
    %1769 = vmatprep.subr.mxu0 0.0
    %1770 = vmatpush1.msra.mxu0 %v395
    %1771 = vmatprep.subr.mxu0 0.0
    %1772 = vmatpush1.msra.mxu0 %v394
    %1773 = vmatprep.subr.mxu0 0.0
    %1774 = vmatpush1.msra.mxu0 %v393
    %1775 = vmatprep.subr.mxu0 0.0
    %1776 = vmatpush1.msra.mxu0 %v392
    %1777 = vmatprep.subr.mxu0 0.0
    %1778 = vmatpush1.msra.mxu0 %v391
    %1779 = vmatprep.subr.mxu0 0.0
    %1780 = vmatpush1.msra.mxu0 %v390
    %1781 = vmatprep.subr.mxu0 0.0
    %1782 = vmatpush1.msra.mxu0 %v389
    %1783 = vmatprep.subr.mxu0 0.0
    %1784 = vmatpush1.msra.mxu0 %v388
    %1785 = vmatprep.subr.mxu0 0.0
    %1786 = vmatpush1.msra.mxu0 %v387
    %1787 = vmatprep.subr.mxu0 0.0
    %1788 = vmatpush1.msra.mxu0 %v386
    %1789 = vmatprep.subr.mxu0 0.0
    %1790 = vmatpush2.msra.mxu0 0.0
    %1791 = vmatprep.subr.mxu0 0.0
    %1792 = vmatpush2.msra.mxu0 0.0
    %1793 = vmatprep.subr.mxu0 0.0
    %1794 = vmatpush2.msra.mxu0 0.0
    %1795 = vmatprep.subr.mxu0 0.0
    %1796 = vmatpush2.msra.mxu0 0.0
    %1797 = vmatprep.subr.mxu0 0.0
    %1798 = vmatpush2.msra.mxu0 0.0
    %1799 = vmatprep.subr.mxu0 0.0
    %1800 = vmatpush2.msra.mxu0 0.0
    %1801 = vmatprep.subr.mxu0 0.0
    %1802 = vmatpush2.msra.mxu0 0.0
    %1803 = vmatprep.subr.mxu0 0.0
    %1804 = vmatpush2.msra.mxu0 0.0
    %1805 = vmatprep.subr.mxu0 0.0
    %1806 = vmatpush2.msra.mxu0 0.0
    %1807 = vmatprep.subr.mxu0 0.0
    %1808 = vmatpush2.msra.mxu0 0.0
    %1809 = vmatprep.subr.mxu0 0.0
    %1810 = vmatpush2.msra.mxu0 0.0
    %1811 = vmatprep.subr.mxu0 0.0
    %1812 = vmatpush2.msra.mxu0 0.0
    %1813 = vmatprep.subr.mxu0 0.0
    %1814 = vmatpush2.msra.mxu0 0.0
    %1815 = vmatprep.subr.mxu0 0.0
    %1816 = vmatpush2.msra.mxu0 0.0
    %1817 = vmatprep.subr.mxu0 0.0
    %1818 = vmatpush2.msra.mxu0 0.0
    %1819 = vmatprep.subr.mxu0 0.0
    %1820 = vmatpush2.msra.mxu0 0.0
    %1821 = vmatprep.mubr.f32.mxu0 0.0
    %1822 = vmatmul.mubr.f32.gmra.mxu0 %v1756
    %v1823 = vpop.f32.mrf.mxu0
    %v1824 = vadd.f32 %v402, %v1823
    %v1825 = vpop.f32.mrf.mxu0
    %1826 = vdwg.mxu0
    %v1827 = vmax.f32 %v1824, 0.0
    %v1829 = vsel %vm537, %v1827, 0
    %1831 = vmatprep.subr.mxu0 0.0
    %1832 = vmatpush1.msra.mxu0 0.0
    %1833 = vmatprep.subr.mxu0 0.0
    %1834 = vmatpush1.msra.mxu0 0.0
    %1835 = vmatprep.subr.mxu0 0.0
    %1836 = vmatpush1.msra.mxu0 0.0
    %1837 = vmatprep.subr.mxu0 0.0
    %1838 = vmatpush1.msra.mxu0 0.0
    %1839 = vmatprep.subr.mxu0 0.0
    %1840 = vmatpush1.msra.mxu0 0.0
    %1841 = vmatprep.subr.mxu0 0.0
    %1842 = vmatpush1.msra.mxu0 0.0
    %1843 = vmatprep.subr.mxu0 0.0
    %1844 = vmatpush1.msra.mxu0 0.0
    %1845 = vmatprep.subr.mxu0 0.0
    %1846 = vmatpush1.msra.mxu0 0.0
    %1847 = vmatprep.subr.mxu0 0.0
    %1848 = vmatpush1.msra.mxu0 0.0
    %1849 = vmatprep.subr.mxu0 0.0
    %1850 = vmatpush1.msra.mxu0 0.0
    %1851 = vmatprep.subr.mxu0 0.0
    %1852 = vmatpush1.msra.mxu0 0.0
    %1853 = vmatprep.subr.mxu0 0.0
    %1854 = vmatpush1.msra.mxu0 0.0
    %1855 = vmatprep.subr.mxu0 0.0
    %1856 = vmatpush1.msra.mxu0 %v406
    %1857 = vmatprep.subr.mxu0 0.0
    %1858 = vmatpush1.msra.mxu0 %v405
    %1859 = vmatprep.subr.mxu0 0.0
    %1860 = vmatpush1.msra.mxu0 %v404
    %1861 = vmatprep.subr.mxu0 0.0
    %1862 = vmatpush1.msra.mxu0 %v403
    %1863 = vmatprep.subr.mxu0 0.0
    %1864 = vmatpush2.msra.mxu0 0.0
    %1865 = vmatprep.subr.mxu0 0.0
    %1866 = vmatpush2.msra.mxu0 0.0
    %1867 = vmatprep.subr.mxu0 0.0
    %1868 = vmatpush2.msra.mxu0 0.0
    %1869 = vmatprep.subr.mxu0 0.0
    %1870 = vmatpush2.msra.mxu0 0.0
    %1871 = vmatprep.subr.mxu0 0.0
    %1872 = vmatpush2.msra.mxu0 0.0
    %1873 = vmatprep.subr.mxu0 0.0
    %1874 = vmatpush2.msra.mxu0 0.0
    %1875 = vmatprep.subr.mxu0 0.0
    %1876 = vmatpush2.msra.mxu0 0.0
    %1877 = vmatprep.subr.mxu0 0.0
    %1878 = vmatpush2.msra.mxu0 0.0
    %1879 = vmatprep.subr.mxu0 0.0
    %1880 = vmatpush2.msra.mxu0 0.0
    %1881 = vmatprep.subr.mxu0 0.0
    %1882 = vmatpush2.msra.mxu0 0.0
    %1883 = vmatprep.subr.mxu0 0.0
    %1884 = vmatpush2.msra.mxu0 0.0
    %1885 = vmatprep.subr.mxu0 0.0
    %1886 = vmatpush2.msra.mxu0 0.0
    %1887 = vmatprep.subr.mxu0 0.0
    %1888 = vmatpush2.msra.mxu0 0.0
    %1889 = vmatprep.subr.mxu0 0.0
    %1890 = vmatpush2.msra.mxu0 0.0
    %1891 = vmatprep.subr.mxu0 0.0
    %1892 = vmatpush2.msra.mxu0 0.0
    %1893 = vmatprep.subr.mxu0 0.0
    %1894 = vmatpush2.msra.mxu0 0.0
    %1895 = vmatprep.mubr.f32.mxu0 0.0
    %1896 = vmatmul.mubr.f32.gmra.mxu0 %v1829
    %v1897 = vpop.f32.mrf.mxu0
    %v1898 = vadd.f32 %v407, %v1897
    %v1899 = vpop.f32.mrf.mxu0
    %1900 = vdwg.mxu0
    %v1901 = vmax.f32 %v1898, 0.0
    %v1902 = vsel %vm119, %v1901, %v1898
    %1903 = vst [vmem:[#allocation11 + $0x6] sm:$0x1] %v1902
    %v1904 = vpack.c.bf16 %v1756, %v1756
    %1905 = vmatprep.subr.bf16.mxu0 0
    %1906 = vmatpush1.bf16.msra.mxu0 %v385
    %1907 = vmatprep.subr.bf16.mxu0 0
    %1908 = vmatpush1.bf16.msra.mxu0 %v384
    %1909 = vmatprep.subr.bf16.mxu0 0
    %1910 = vmatpush1.bf16.msra.mxu0 %v383
    %1911 = vmatprep.subr.bf16.mxu0 0
    %1912 = vmatpush1.bf16.msra.mxu0 %v382
    %1913 = vmatprep.subr.bf16.mxu0 0
    %1914 = vmatpush1.bf16.msra.mxu0 %v381
    %1915 = vmatprep.subr.bf16.mxu0 0
    %1916 = vmatpush1.bf16.msra.mxu0 %v380
    %1917 = vmatprep.subr.bf16.mxu0 0
    %1918 = vmatpush1.bf16.msra.mxu0 %v379
    %1919 = vmatprep.subr.bf16.mxu0 0
    %1920 = vmatpush1.bf16.msra.mxu0 %v378
    %1921 = vmatprep.subr.bf16.mxu0 0
    %1922 = vmatpush2.bf16.msra.mxu0 0
    %1923 = vmatprep.subr.bf16.mxu0 0
    %1924 = vmatpush2.bf16.msra.mxu0 0
    %1925 = vmatprep.subr.bf16.mxu0 0
    %1926 = vmatpush2.bf16.msra.mxu0 0
    %1927 = vmatprep.subr.bf16.mxu0 0
    %1928 = vmatpush2.bf16.msra.mxu0 0
    %1929 = vmatprep.subr.bf16.mxu0 0
    %1930 = vmatpush2.bf16.msra.mxu0 0
    %1931 = vmatprep.subr.bf16.mxu0 0
    %1932 = vmatpush2.bf16.msra.mxu0 0
    %1933 = vmatprep.subr.bf16.mxu0 0
    %1934 = vmatpush2.bf16.msra.mxu0 0
    %1935 = vmatprep.subr.bf16.mxu0 0
    %1936 = vmatpush2.bf16.msra.mxu0 0
    %1937 = vmatprep.mubr.bf16.mxu0 0
    %1938 = vmatmul.mubr.bf16.gmra.mxu0 %v1904
    %v1939 = vpop.f32.mrf.mxu0
    %v1940 = vadd.f32 0.0, %v1939
    %v1941 = vpop.f32.mrf.mxu0
    %v1942 = vpop.f32.mrf.mxu0
    %v1943 = vpop.f32.mrf.mxu0
    %1944 = vdwg.mxu0
    %v1946 = vrot.slane %v1940, 1
    %v1948 = vadd.f32 %v361, %v1946
    %v1949 = vtanh.pop %v1948
    %v1950 = vmul.f32 %v114, %v1949
    %v1951 = vadd.f32 %v1950, %v115
    %v1953 = vrot.slane %v1951, 7
    %1955 = vrot.lane.b32.xlu0 %v1953, 96
    %v1956 = vpop.permute.xlu0 %1955
    %1957 = vrot.lane.b32.xlu0 %v1953, 64
    %v1958 = vpop.permute.xlu0 %1957
    %1959 = vrot.lane.b32.xlu0 %v1953, 32
    %v1960 = vpop.permute.xlu0 %1959
    %v1961 = vmul.f32 %v1956, %v1754
    %v1963 = vrot.slane %v1958, 1
    %v1965 = vmul.f32 %v1951, %v1963
    %v1967 = vrot.slane %v1965, 7
    %v1969 = vadd.f32 %v1961, %v1967
    %v1970 = vtanh.pop %v1969
    %v1971 = vmul.f32 %v1960, %v1970
    %1972 = vmatprep.subr.mxu0 0.0
    %1973 = vmatpush1.msra.mxu0 %v401
    %1974 = vmatprep.subr.mxu0 0.0
    %1975 = vmatpush1.msra.mxu0 %v400
    %1976 = vmatprep.subr.mxu0 0.0
    %1977 = vmatpush1.msra.mxu0 %v399
    %1978 = vmatprep.subr.mxu0 0.0
    %1979 = vmatpush1.msra.mxu0 %v398
    %1980 = vmatprep.subr.mxu0 0.0
    %1981 = vmatpush1.msra.mxu0 %v397
    %1982 = vmatprep.subr.mxu0 0.0
    %1983 = vmatpush1.msra.mxu0 %v396
    %1984 = vmatprep.subr.mxu0 0.0
    %1985 = vmatpush1.msra.mxu0 %v395
    %1986 = vmatprep.subr.mxu0 0.0
    %1987 = vmatpush1.msra.mxu0 %v394
    %1988 = vmatprep.subr.mxu0 0.0
    %1989 = vmatpush1.msra.mxu0 %v393
    %1990 = vmatprep.subr.mxu0 0.0
    %1991 = vmatpush1.msra.mxu0 %v392
    %1992 = vmatprep.subr.mxu0 0.0
    %1993 = vmatpush1.msra.mxu0 %v391
    %1994 = vmatprep.subr.mxu0 0.0
    %1995 = vmatpush1.msra.mxu0 %v390
    %1996 = vmatprep.subr.mxu0 0.0
    %1997 = vmatpush1.msra.mxu0 %v389
    %1998 = vmatprep.subr.mxu0 0.0
    %1999 = vmatpush1.msra.mxu0 %v388
    %2000 = vmatprep.subr.mxu0 0.0
    %2001 = vmatpush1.msra.mxu0 %v387
    %2002 = vmatprep.subr.mxu0 0.0
    %2003 = vmatpush1.msra.mxu0 %v386
    %2004 = vmatprep.subr.mxu0 0.0
    %2005 = vmatpush2.msra.mxu0 0.0
    %2006 = vmatprep.subr.mxu0 0.0
    %2007 = vmatpush2.msra.mxu0 0.0
    %2008 = vmatprep.subr.mxu0 0.0
    %2009 = vmatpush2.msra.mxu0 0.0
    %2010 = vmatprep.subr.mxu0 0.0
    %2011 = vmatpush2.msra.mxu0 0.0
    %2012 = vmatprep.subr.mxu0 0.0
    %2013 = vmatpush2.msra.mxu0 0.0
    %2014 = vmatprep.subr.mxu0 0.0
    %2015 = vmatpush2.msra.mxu0 0.0
    %2016 = vmatprep.subr.mxu0 0.0
    %2017 = vmatpush2.msra.mxu0 0.0
    %2018 = vmatprep.subr.mxu0 0.0
    %2019 = vmatpush2.msra.mxu0 0.0
    %2020 = vmatprep.subr.mxu0 0.0
    %2021 = vmatpush2.msra.mxu0 0.0
    %2022 = vmatprep.subr.mxu0 0.0
    %2023 = vmatpush2.msra.mxu0 0.0
    %2024 = vmatprep.subr.mxu0 0.0
    %2025 = vmatpush2.msra.mxu0 0.0
    %2026 = vmatprep.subr.mxu0 0.0
    %2027 = vmatpush2.msra.mxu0 0.0
    %2028 = vmatprep.subr.mxu0 0.0
    %2029 = vmatpush2.msra.mxu0 0.0
    %2030 = vmatprep.subr.mxu0 0.0
    %2031 = vmatpush2.msra.mxu0 0.0
    %2032 = vmatprep.subr.mxu0 0.0
    %2033 = vmatpush2.msra.mxu0 0.0
    %2034 = vmatprep.subr.mxu0 0.0
    %2035 = vmatpush2.msra.mxu0 0.0
    %2036 = vmatprep.mubr.f32.mxu0 0.0
    %2037 = vmatmul.mubr.f32.gmra.mxu0 %v1971
    %v2038 = vpop.f32.mrf.mxu0
    %v2039 = vadd.f32 %v402, %v2038
    %v2040 = vpop.f32.mrf.mxu0
    %2041 = vdwg.mxu0
    %v2042 = vmax.f32 %v2039, 0.0
    %v2044 = vsel %vm537, %v2042, 0
    %2046 = vmatprep.subr.mxu0 0.0
    %2047 = vmatpush1.msra.mxu0 0.0
    %2048 = vmatprep.subr.mxu0 0.0
    %2049 = vmatpush1.msra.mxu0 0.0
    %2050 = vmatprep.subr.mxu0 0.0
    %2051 = vmatpush1.msra.mxu0 0.0
    %2052 = vmatprep.subr.mxu0 0.0
    %2053 = vmatpush1.msra.mxu0 0.0
    %2054 = vmatprep.subr.mxu0 0.0
    %2055 = vmatpush1.msra.mxu0 0.0
    %2056 = vmatprep.subr.mxu0 0.0
    %2057 = vmatpush1.msra.mxu0 0.0
    %2058 = vmatprep.subr.mxu0 0.0
    %2059 = vmatpush1.msra.mxu0 0.0
    %2060 = vmatprep.subr.mxu0 0.0
    %2061 = vmatpush1.msra.mxu0 0.0
    %2062 = vmatprep.subr.mxu0 0.0
    %2063 = vmatpush1.msra.mxu0 0.0
    %2064 = vmatprep.subr.mxu0 0.0
    %2065 = vmatpush1.msra.mxu0 0.0
    %2066 = vmatprep.subr.mxu0 0.0
    %2067 = vmatpush1.msra.mxu0 0.0
    %2068 = vmatprep.subr.mxu0 0.0
    %2069 = vmatpush1.msra.mxu0 0.0
    %2070 = vmatprep.subr.mxu0 0.0
    %2071 = vmatpush1.msra.mxu0 %v406
    %2072 = vmatprep.subr.mxu0 0.0
    %2073 = vmatpush1.msra.mxu0 %v405
    %2074 = vmatprep.subr.mxu0 0.0
    %2075 = vmatpush1.msra.mxu0 %v404
    %2076 = vmatprep.subr.mxu0 0.0
    %2077 = vmatpush1.msra.mxu0 %v403
    %2078 = vmatprep.subr.mxu0 0.0
    %2079 = vmatpush2.msra.mxu0 0.0
    %2080 = vmatprep.subr.mxu0 0.0
    %2081 = vmatpush2.msra.mxu0 0.0
    %2082 = vmatprep.subr.mxu0 0.0
    %2083 = vmatpush2.msra.mxu0 0.0
    %2084 = vmatprep.subr.mxu0 0.0
    %2085 = vmatpush2.msra.mxu0 0.0
    %2086 = vmatprep.subr.mxu0 0.0
    %2087 = vmatpush2.msra.mxu0 0.0
    %2088 = vmatprep.subr.mxu0 0.0
    %2089 = vmatpush2.msra.mxu0 0.0
    %2090 = vmatprep.subr.mxu0 0.0
    %2091 = vmatpush2.msra.mxu0 0.0
    %2092 = vmatprep.subr.mxu0 0.0
    %2093 = vmatpush2.msra.mxu0 0.0
    %2094 = vmatprep.subr.mxu0 0.0
    %2095 = vmatpush2.msra.mxu0 0.0
    %2096 = vmatprep.subr.mxu0 0.0
    %2097 = vmatpush2.msra.mxu0 0.0
    %2098 = vmatprep.subr.mxu0 0.0
    %2099 = vmatpush2.msra.mxu0 0.0
    %2100 = vmatprep.subr.mxu0 0.0
    %2101 = vmatpush2.msra.mxu0 0.0
    %2102 = vmatprep.subr.mxu0 0.0
    %2103 = vmatpush2.msra.mxu0 0.0
    %2104 = vmatprep.subr.mxu0 0.0
    %2105 = vmatpush2.msra.mxu0 0.0
    %2106 = vmatprep.subr.mxu0 0.0
    %2107 = vmatpush2.msra.mxu0 0.0
    %2108 = vmatprep.subr.mxu0 0.0
    %2109 = vmatpush2.msra.mxu0 0.0
    %2110 = vmatprep.mubr.f32.mxu0 0.0
    %2111 = vmatmul.mubr.f32.gmra.mxu0 %v2044
    %v2112 = vpop.f32.mrf.mxu0
    %v2113 = vadd.f32 %v407, %v2112
    %v2114 = vpop.f32.mrf.mxu0
    %2115 = vdwg.mxu0
    %v2116 = vmax.f32 %v2113, 0.0
    %v2117 = vsel %vm119, %v2116, %v2113
    %2118 = vst [vmem:[#allocation11 + $0x7] sm:$0x1] %v2117
    %v2119 = vmul.f32 %v1971, %v118
    %2120 = vst [vmem:[#allocation12] sm:$0x1] %v2119
    %v2121 = vmul.f32 %v1969, %v118
    %2122 = vst [vmem:[#allocation12 + $0x1] sm:$0x1] %v2121
    // Predicated region
    $region74: #{tpu_custom_call.1} parent=1 // pred_check
      _
    $region75: #{tpu_custom_call.1} parent=1 // pred_check_branch
      %2124 = sbr.rel (0) target = $region77
    $region76: #{tpu_custom_call.1} parent=1 // pred_region
      %s2126 = ssub.s32 128, 128
      %2127 = vsyncadd [#allocation4], %s2126
      %s2129 = sshll.u32 [#allocation11], 4
      %s2130 = int_to_ptr.vmem [resolvable:$true] %s2129
      %2132 = dma.vmem_to_hbm [thread:$0]  %s2130, 128, %s13, [#allocation4]
    $region77: #{tpu_custom_call.1} parent=1 // pred_fallthru
      _
    // Predicated region
    $region78: #{tpu_custom_call.1} parent=1 // pred_check
      _
    $region79: #{tpu_custom_call.1} parent=1 // pred_check_branch
      %2134 = sbr.rel (0) target = $region81
    $region80: #{tpu_custom_call.1} parent=1 // pred_region
      %s2136 = ssub.s32 32, 32
      %2137 = vsyncadd [#allocation13], %s2136
      %s2139 = sshll.u32 [#allocation12], 4
      %s2140 = int_to_ptr.vmem [resolvable:$true] %s2139
      %2142 = dma.vmem_to_hbm [thread:$0]  %s2140, 32, %s14, [#allocation13]
    $region81: #{tpu_custom_call.1} parent=1 // pred_fallthru
      _
    // Predicated region
    $region82: #{tpu_custom_call.1} parent=1 // pred_check
      _
    $region83: #{tpu_custom_call.1} parent=1 // pred_check_branch
      %2144 = sbr.rel (0) target = $region85
    $region84: #{tpu_custom_call.1} parent=1 // pred_region
      %2145 = dma.done [#allocation4], 128
    $region85: #{tpu_custom_call.1} parent=1 // pred_fallthru
      _
    // Predicated region
    $region86: #{tpu_custom_call.1} parent=1 // pred_check
      _
    $region87: #{tpu_custom_call.1} parent=1 // pred_check_branch
      %2147 = sbr.rel (0) target = $region89
    $region88: #{tpu_custom_call.1} parent=1 // pred_region
      %2148 = dma.done [#allocation13], 32
    $region89: #{tpu_custom_call.1} parent=1 // pred_fallthru
      _
    %2149 = vsyncpa [#allocation3], 1
    %2150 = vsyncpa [#allocation6], 1
    %2151 = vsyncpa [#allocation9], 1
    %2152 = vsyncpa [#allocation4], 1
    %2153 = vsyncpa [#allocation13], 1

</llo_original>
